<compile_context>
chip_gen: v7x
topology: tpu7x:2x2x1
jax: 0.10.0
libtpu: 0.0.40
codegen_flags: <defaults>
</compile_context>

<pallas_src>
import functools

import jax
import jax.numpy as jnp
from jax.experimental import pallas as pl
from jax.experimental.pallas import tpu as pltpu

IN_DIM = 190
IN_PAD = 256      # 190 -> 256: lane-aligned x, sublane-aligned w1
OUT_DIM = 10
OUT_PAD = 128     # 10 -> 128: lane-dense output stores
H1, H2, H3 = 256, 512, 512

# Batch-tile cap.  1024 amortizes per-grid-step pipeline overhead on v6e/v7x;
# on v5e (slower MXU, 16 MiB default scoped VMEM) pass tb_max=512 instead.
TB_MAX = 1024


def _round_up(n, m):
    return ((n + m - 1) // m) * m


def dqn_kernel(x_ref,
               w1_ref, b1_ref,
               w2_ref, b2_ref,
               w3_ref, b3_ref,
               w4_ref, b4_ref,
               o_ref):
    # fc1 + relu (f32 MXU accumulate, f32 epilogue, bf16 feed to next MXU op)
    h = jnp.dot(x_ref[...], w1_ref[...], preferred_element_type=jnp.float32)
    h = jnp.maximum(h + b1_ref[...], 0.0).astype(jnp.bfloat16)
    # fc2 + relu
    h = jnp.dot(h, w2_ref[...], preferred_element_type=jnp.float32)
    h = jnp.maximum(h + b2_ref[...], 0.0).astype(jnp.bfloat16)
    # fc3 + relu
    h = jnp.dot(h, w3_ref[...], preferred_element_type=jnp.float32)
    h = jnp.maximum(h + b3_ref[...], 0.0).astype(jnp.bfloat16)
    # fc4 + relu (the original module applies ReLU to the output layer too)
    h = jnp.dot(h, w4_ref[...], preferred_element_type=jnp.float32)
    h = jnp.maximum(h + b4_ref[...], 0.0)
    o_ref[...] = h.astype(o_ref.dtype)     # bf16 lane-dense store


def pack_params(params):
    """One-time packing of PyTorch-convention params into the kernel layout.

    Call ONCE at model-load time (not per forward).  Weights come in as
    (in, out) f32 (already transposed vs. PyTorch's (out, in)); biases as
    (out,).  Returns bf16 weights (w1 zero-padded on the input axis, w4/b4
    zero-padded on the output axis) and f32 (1, out) biases.
    """
    (w1, b1), (w2, b2), (w3, b3), (w4, b4) = params
    w1p = jnp.zeros((IN_PAD, H1), jnp.bfloat16).at[:IN_DIM, :].set(
        w1.astype(jnp.bfloat16))
    w2p = w2.astype(jnp.bfloat16)
    w3p = w3.astype(jnp.bfloat16)
    w4p = jnp.zeros((H3, OUT_PAD), jnp.bfloat16).at[:, :OUT_DIM].set(
        w4.astype(jnp.bfloat16))
    b1p = b1.astype(jnp.float32).reshape(1, H1)
    b2p = b2.astype(jnp.float32).reshape(1, H2)
    b3p = b3.astype(jnp.float32).reshape(1, H3)
    b4p = jnp.zeros((1, OUT_PAD), jnp.float32).at[0, :OUT_DIM].set(
        b4.astype(jnp.float32))
    return (w1p, b1p, w2p, b2p, w3p, b3p, w4p, b4p)


@functools.partial(jax.jit, static_argnames=("tb_max",))
def dqn_forward(x, packed_params, tb_max=TB_MAX):
    """Forward pass.  `packed_params` must come from `pack_params` (hoisted)."""
    B = x.shape[0]
    assert x.shape[1] == IN_DIM
    w1p, b1p, w2p, b2p, w3p, b3p, w4p, b4p = packed_params

    # --- batch tiling ---------------------------------------------------
    # num_tiles chosen so padding waste is <8 rows/tile; force >=2 grid steps
    # whenever there's enough work (B >= 16) so v7x's two TensorCores both get
    # a share of the "parallel" batch axis.
    num_tiles = max(pl.cdiv(B, tb_max), 2 if B >= 16 else 1)
    tb = _round_up(pl.cdiv(B, num_tiles), 8)
    b_pad = num_tiles * tb
    grid = (num_tiles,)

    # Pad batch + features, cast to bf16 for the MXU feed.  With
    # allow_input_fusion=[0] XLA may fuse this producer into the input DMA of
    # the pallas_call instead of materializing the padded copy in HBM.
    xp = jnp.zeros((b_pad, IN_PAD), jnp.bfloat16)
    xp = xp.at[:B, :IN_DIM].set(x.astype(jnp.bfloat16))

    # Weights/biases: constant index_map -> DMA'd once, VMEM-resident across
    # the whole batch grid.
    const = lambda i: (0, 0)
    in_specs = [
        pl.BlockSpec((tb, IN_PAD), lambda i: (i, 0)),   # x: tiled over batch
        pl.BlockSpec((IN_PAD, H1), const),              # w1
        pl.BlockSpec((1, H1), const),                   # b1
        pl.BlockSpec((H1, H2), const),                  # w2
        pl.BlockSpec((1, H2), const),                   # b2
        pl.BlockSpec((H2, H3), const),                  # w3
        pl.BlockSpec((1, H3), const),                   # b3
        pl.BlockSpec((H3, OUT_PAD), const),             # w4
        pl.BlockSpec((1, OUT_PAD), const),              # b4
    ]
    out_specs = pl.BlockSpec((tb, OUT_PAD), lambda i: (i, 0))

    weight_bytes = sum(int(a.size) * a.dtype.itemsize
                       for a in (w1p, b1p, w2p, b2p, w3p, b3p, w4p, b4p))
    flops = 2 * b_pad * (IN_PAD * H1 + H1 * H2 + H2 * H3 + H3 * OUT_PAD)
    bytes_accessed = weight_bytes + int(xp.size) * 2 + b_pad * OUT_PAD * 2
    cost = pl.CostEstimate(flops=flops, transcendentals=0,
                           bytes_accessed=bytes_accessed)

    out_padded = pl.pallas_call(
        dqn_kernel,
        out_shape=jax.ShapeDtypeStruct((b_pad, OUT_PAD), jnp.bfloat16),
        grid=grid,
        in_specs=in_specs,
        out_specs=out_specs,
        compiler_params=pltpu.CompilerParams(
            dimension_semantics=("parallel",),   # batch axis split across TCs
            vmem_limit_bytes=32 * 1024 * 1024,
            allow_input_fusion=[0],              # fuse x pad/cast into input DMA
        ),
        cost_estimate=cost,
    )(xp, w1p, b1p, w2p, b2p, w3p, b3p, w4p, b4p)

    return out_padded[:B, :OUT_DIM].astype(jnp.float32)


def init_params(key):
    """PyTorch nn.Linear-style init: U(-1/sqrt(fan_in), 1/sqrt(fan_in)).

    Weights are stored as (in, out) (transposed vs. PyTorch's (out, in)) so the
    kernel computes y = x @ W + b directly.  Biases are stored as (out,).
    """
    dims = [(IN_DIM, H1), (H1, H2), (H2, H3), (H3, OUT_DIM)]
    params = []
    for fan_in, fan_out in dims:
        key, kw, kb = jax.random.split(key, 3)
        bound = 1.0 / jnp.sqrt(jnp.float32(fan_in))
        w = jax.random.uniform(kw, (fan_in, fan_out), jnp.float32, -bound, bound)
        b = jax.random.uniform(kb, (fan_out,), jnp.float32, -bound, bound)
        params.append((w, b))
    return params


def reference_forward_f32(x, params):
    h = x
    for (w, b) in params:
        h = jnp.maximum(h @ w + b, 0.0)
    return h


def reference_forward_bf16(x, params):
    """Mirrors the kernel's bf16 weight/activation/output quantization."""
    h = x.astype(jnp.bfloat16)
    for layer, (w, b) in enumerate(params):
        acc = jnp.dot(h, w.astype(jnp.bfloat16),
                      preferred_element_type=jnp.float32)
        h = jnp.maximum(acc + b.astype(jnp.float32), 0.0)
        if layer < len(params) - 1:
            h = h.astype(jnp.bfloat16)
    # Kernel stores the final result as bf16 before the wrapper casts back.
    return h.astype(jnp.bfloat16).astype(jnp.float32)


if __name__ == "__main__":
    key = jax.random.PRNGKey(0)
    kx, kp = jax.random.split(key)
    B = 8
    x = jax.random.normal(kx, (B, IN_DIM), jnp.float32)
    params = init_params(kp)

    # Pack ONCE (hoisted out of the forward path), then reuse for every call.
    packed = jax.block_until_ready(pack_params(params))

    out = jax.block_until_ready(dqn_forward(x, packed))

    assert out.shape == (B, OUT_DIM), out.shape
    ref_q = reference_forward_bf16(x, params)   # same quantization as kernel
    ref_f = reference_forward_f32(x, params)    # full-precision sanity check
    assert jnp.allclose(out, ref_q, atol=3e-2, rtol=3e-2), "mismatch vs bf16 reference"
    assert jnp.allclose(out, ref_f, atol=1e-1, rtol=1e-1), "mismatch vs f32 reference"
    print("KERNEL_OK")
</pallas_src>

<mosaic_0001>
module attributes {stable_mosaic.version = 11 : i64} {
  func.func @dqn_kernel(%arg0: i32, %arg1: memref<8x256xbf16, #tpu.memory_space<vmem>>, %arg2: memref<256x256xbf16, #tpu.memory_space<vmem>>, %arg3: memref<1x256xf32, #tpu.memory_space<vmem>>, %arg4: memref<256x512xbf16, #tpu.memory_space<vmem>>, %arg5: memref<1x512xf32, #tpu.memory_space<vmem>>, %arg6: memref<512x512xbf16, #tpu.memory_space<vmem>>, %arg7: memref<1x512xf32, #tpu.memory_space<vmem>>, %arg8: memref<512x128xbf16, #tpu.memory_space<vmem>>, %arg9: memref<1x128xf32, #tpu.memory_space<vmem>>, %arg10: memref<8x128xbf16, #tpu.memory_space<vmem>>) attributes {dimension_semantics = [#tpu.dimension_semantics<parallel>], iteration_bounds = array<i64: 1>, scalar_prefetch = 0 : i64, scratch_operands = 0 : i64, tpu.core_type = #tpu.core_type<tc>, window_params = [{transform_indices = @transform_0, window_bounds = array<i64: 8, 256>}, {pipeline_mode = #tpu.pipeline_mode<synchronous>, transform_indices = @transform_1, window_bounds = array<i64: 256, 256>}, {pipeline_mode = #tpu.pipeline_mode<synchronous>, transform_indices = @transform_2, window_bounds = array<i64: 1, 256>}, {pipeline_mode = #tpu.pipeline_mode<synchronous>, transform_indices = @transform_3, window_bounds = array<i64: 256, 512>}, {pipeline_mode = #tpu.pipeline_mode<synchronous>, transform_indices = @transform_4, window_bounds = array<i64: 1, 512>}, {pipeline_mode = #tpu.pipeline_mode<synchronous>, transform_indices = @transform_5, window_bounds = array<i64: 512, 512>}, {pipeline_mode = #tpu.pipeline_mode<synchronous>, transform_indices = @transform_6, window_bounds = array<i64: 1, 512>}, {pipeline_mode = #tpu.pipeline_mode<synchronous>, transform_indices = @transform_7, window_bounds = array<i64: 512, 128>}, {pipeline_mode = #tpu.pipeline_mode<synchronous>, transform_indices = @transform_8, window_bounds = array<i64: 1, 128>}, {transform_indices = @transform_9, window_bounds = array<i64: 8, 128>}]} {
    %c0 = arith.constant 0 : index
    %c0_0 = arith.constant 0 : index
    %0 = vector.load %arg1[%c0, %c0_0] : memref<8x256xbf16, #tpu.memory_space<vmem>>, vector<8x256xbf16>
    %c0_1 = arith.constant 0 : index
    %c0_2 = arith.constant 0 : index
    %1 = vector.load %arg2[%c0_1, %c0_2] : memref<256x256xbf16, #tpu.memory_space<vmem>>, vector<256x256xbf16>
    %cst = arith.constant dense<0.000000e+00> : vector<8x256xf32>
    %2 = tpu.matmul %0, %1, %cst {dimension_numbers = #tpu.dot_dimension_numbers<[1], [0], [0], [1], [0, 0, 1, 1], [], []>} : vector<8x256xbf16>, vector<256x256xbf16>, vector<8x256xf32> -> vector<8x256xf32>
    %c0_3 = arith.constant 0 : index
    %c0_4 = arith.constant 0 : index
    %3 = vector.load %arg3[%c0_3, %c0_4] : memref<1x256xf32, #tpu.memory_space<vmem>>, vector<1x256xf32>
    %4 = vector.broadcast %3 : vector<1x256xf32> to vector<8x256xf32>
    %5 = arith.addf %2, %4 : vector<8x256xf32>
    %cst_5 = arith.constant 0.000000e+00 : f32
    %6 = vector.broadcast %cst_5 : f32 to vector<8x256xf32>
    %7 = arith.maximumf %5, %6 : vector<8x256xf32>
    %8 = arith.truncf %7 : vector<8x256xf32> to vector<8x256xbf16>
    %c0_6 = arith.constant 0 : index
    %c0_7 = arith.constant 0 : index
    %9 = vector.load %arg4[%c0_6, %c0_7] : memref<256x512xbf16, #tpu.memory_space<vmem>>, vector<256x512xbf16>
    %cst_8 = arith.constant dense<0.000000e+00> : vector<8x512xf32>
    %10 = tpu.matmul %8, %9, %cst_8 {dimension_numbers = #tpu.dot_dimension_numbers<[1], [0], [0], [1], [0, 0, 1, 1], [], []>} : vector<8x256xbf16>, vector<256x512xbf16>, vector<8x512xf32> -> vector<8x512xf32>
    %c0_9 = arith.constant 0 : index
    %c0_10 = arith.constant 0 : index
    %11 = vector.load %arg5[%c0_9, %c0_10] : memref<1x512xf32, #tpu.memory_space<vmem>>, vector<1x512xf32>
    %12 = vector.broadcast %11 : vector<1x512xf32> to vector<8x512xf32>
    %13 = arith.addf %10, %12 : vector<8x512xf32>
    %cst_11 = arith.constant 0.000000e+00 : f32
    %14 = vector.broadcast %cst_11 : f32 to vector<8x512xf32>
    %15 = arith.maximumf %13, %14 : vector<8x512xf32>
    %16 = arith.truncf %15 : vector<8x512xf32> to vector<8x512xbf16>
    %c0_12 = arith.constant 0 : index
    %c0_13 = arith.constant 0 : index
    %17 = vector.load %arg6[%c0_12, %c0_13] : memref<512x512xbf16, #tpu.memory_space<vmem>>, vector<512x512xbf16>
    %cst_14 = arith.constant dense<0.000000e+00> : vector<8x512xf32>
    %18 = tpu.matmul %16, %17, %cst_14 {dimension_numbers = #tpu.dot_dimension_numbers<[1], [0], [0], [1], [0, 0, 1, 1], [], []>} : vector<8x512xbf16>, vector<512x512xbf16>, vector<8x512xf32> -> vector<8x512xf32>
    %c0_15 = arith.constant 0 : index
    %c0_16 = arith.constant 0 : index
    %19 = vector.load %arg7[%c0_15, %c0_16] : memref<1x512xf32, #tpu.memory_space<vmem>>, vector<1x512xf32>
    %20 = vector.broadcast %19 : vector<1x512xf32> to vector<8x512xf32>
    %21 = arith.addf %18, %20 : vector<8x512xf32>
    %cst_17 = arith.constant 0.000000e+00 : f32
    %22 = vector.broadcast %cst_17 : f32 to vector<8x512xf32>
    %23 = arith.maximumf %21, %22 : vector<8x512xf32>
    %24 = arith.truncf %23 : vector<8x512xf32> to vector<8x512xbf16>
    %c0_18 = arith.constant 0 : index
    %c0_19 = arith.constant 0 : index
    %25 = vector.load %arg8[%c0_18, %c0_19] : memref<512x128xbf16, #tpu.memory_space<vmem>>, vector<512x128xbf16>
    %cst_20 = arith.constant dense<0.000000e+00> : vector<8x128xf32>
    %26 = tpu.matmul %24, %25, %cst_20 {dimension_numbers = #tpu.dot_dimension_numbers<[1], [0], [0], [1], [0, 0, 1, 1], [], []>} : vector<8x512xbf16>, vector<512x128xbf16>, vector<8x128xf32> -> vector<8x128xf32>
    %c0_21 = arith.constant 0 : index
    %c0_22 = arith.constant 0 : index
    %27 = vector.load %arg9[%c0_21, %c0_22] : memref<1x128xf32, #tpu.memory_space<vmem>>, vector<1x128xf32>
    %28 = vector.broadcast %27 : vector<1x128xf32> to vector<8x128xf32>
    %29 = arith.addf %26, %28 : vector<8x128xf32>
    %cst_23 = arith.constant 0.000000e+00 : f32
    %30 = vector.broadcast %cst_23 : f32 to vector<8x128xf32>
    %31 = arith.maximumf %29, %30 : vector<8x128xf32>
    %32 = arith.truncf %31 : vector<8x128xf32> to vector<8x128xbf16>
    %c0_24 = arith.constant 0 : index
    %c0_25 = arith.constant 0 : index
    %33 = vector.load %arg10[%c0_24, %c0_25] : memref<8x128xbf16, #tpu.memory_space<vmem>>, vector<8x128xbf16>
    tpu.vector_store %arg10[%c0_24, %c0_25], %32 {strides = array<i32>} : memref<8x128xbf16, #tpu.memory_space<vmem>>, vector<8x128xbf16>,
    return
  }
  func.func @transform_0(%arg0: i32) -> (i32, i32) {
    %c0_i32 = arith.constant 0 : i32
    %c0_i32_0 = arith.constant 0 : i32
    return %arg0, %c0_i32 : i32, i32
  }
  func.func @transform_1(%arg0: i32) -> (i32, i32) {
    %c0_i32 = arith.constant 0 : i32
    %c0_i32_0 = arith.constant 0 : i32
    %c0_i32_1 = arith.constant 0 : i32
    return %c0_i32, %c0_i32_0 : i32, i32
  }
  func.func @transform_2(%arg0: i32) -> (i32, i32) {
    %c0_i32 = arith.constant 0 : i32
    %c0_i32_0 = arith.constant 0 : i32
    %c0_i32_1 = arith.constant 0 : i32
    return %c0_i32, %c0_i32_0 : i32, i32
  }
  func.func @transform_3(%arg0: i32) -> (i32, i32) {
    %c0_i32 = arith.constant 0 : i32
    %c0_i32_0 = arith.constant 0 : i32
    %c0_i32_1 = arith.constant 0 : i32
    return %c0_i32, %c0_i32_0 : i32, i32
  }
  func.func @transform_4(%arg0: i32) -> (i32, i32) {
    %c0_i32 = arith.constant 0 : i32
    %c0_i32_0 = arith.constant 0 : i32
    %c0_i32_1 = arith.constant 0 : i32
    return %c0_i32, %c0_i32_0 : i32, i32
  }
  func.func @transform_5(%arg0: i32) -> (i32, i32) {
    %c0_i32 = arith.constant 0 : i32
    %c0_i32_0 = arith.constant 0 : i32
    %c0_i32_1 = arith.constant 0 : i32
    return %c0_i32, %c0_i32_0 : i32, i32
  }
  func.func @transform_6(%arg0: i32) -> (i32, i32) {
    %c0_i32 = arith.constant 0 : i32
    %c0_i32_0 = arith.constant 0 : i32
    %c0_i32_1 = arith.constant 0 : i32
    return %c0_i32, %c0_i32_0 : i32, i32
  }
  func.func @transform_7(%arg0: i32) -> (i32, i32) {
    %c0_i32 = arith.constant 0 : i32
    %c0_i32_0 = arith.constant 0 : i32
    %c0_i32_1 = arith.constant 0 : i32
    return %c0_i32, %c0_i32_0 : i32, i32
  }
  func.func @transform_8(%arg0: i32) -> (i32, i32) {
    %c0_i32 = arith.constant 0 : i32
    %c0_i32_0 = arith.constant 0 : i32
    %c0_i32_1 = arith.constant 0 : i32
    return %c0_i32, %c0_i32_0 : i32, i32
  }
  func.func @transform_9(%arg0: i32) -> (i32, i32) {
    %c0_i32 = arith.constant 0 : i32
    %c0_i32_0 = arith.constant 0 : i32
    return %arg0, %c0_i32 : i32, i32
  }
}

</mosaic_0001>

<llo_original>
// kernel: dqn_forward.1
$region0: #{dqn_forward.1}
  #allocation0 [shape = 'u32[]', space=smem, size = 0x4, offset = 0x4, fixed_abs, tag = 'smem constant byte address 0x4 - core index']
  #allocation1 [shape = 'u32[144,128]{1,0:T(1,128)}', space=vmem, size = 0x12000, scoped, tag = 'internal scratch']
  %s0 = inlined_call_operand.vmem [shape: bf16[8,256], index: 0, kind: input, shape index: {}]
  %s1 = inlined_call_operand.hbm [shape: bf16[256,256], index: 1, kind: input, shape index: {}]
  %s2 = inlined_call_operand.vmem [shape: f32[1,256], index: 2, kind: input, shape index: {}]
  %s3 = inlined_call_operand.hbm [shape: bf16[256,512], index: 3, kind: input, shape index: {}]
  %s4 = inlined_call_operand.vmem [shape: f32[1,512], index: 4, kind: input, shape index: {}]
  %s5 = inlined_call_operand.hbm [shape: bf16[512,512], index: 5, kind: input, shape index: {}]
  %s6 = inlined_call_operand.vmem [shape: f32[1,512], index: 6, kind: input, shape index: {}]
  %s7 = inlined_call_operand.hbm [shape: bf16[512,128], index: 7, kind: input, shape index: {}]
  %s8 = inlined_call_operand.vmem [shape: f32[1,128], index: 8, kind: input, shape index: {}]
  %s9 = inlined_call_operand.vmem [shape: bf16[8,128], index: 9, kind: output, shape index: {}]
  %s10 = sld [smem:[#allocation0]]
  $region62: #{dqn_forward.1} parent=0
    _
  %s12 = ssub.s32 1, %s10
  %s13 = scalar_select 0, %s12, %s10
  $region1: #{dqn_forward.1} parent=0
    #allocation2 [shape = 'u8[131072]{0}', space=vmem, size = 0x20000, scoped, tag = 'input window, operand 1, single buffered']
    #allocation3 [shape = 's32[1]{0}', space=sflag, size = 0x4, scoped, tag = 'scoped memory for dqn_forward.1']
    #allocation4 [shape = 'u8[262144]{0}', space=vmem, size = 0x40000, scoped, tag = 'input window, operand 3, single buffered']
    #allocation5 [shape = 's32[1]{0}', space=sflag, size = 0x4, scoped, tag = 'scoped memory for dqn_forward.1']
    #allocation6 [shape = 'u8[524288]{0}', space=vmem, size = 0x80000, scoped, tag = 'input window, operand 5, single buffered']
    #allocation7 [shape = 'u8[131072]{0}', space=vmem, size = 0x20000, scoped, tag = 'input window, operand 7, single buffered']
    #allocation8 [shape = 's32[1]{0}', space=sflag, size = 0x4, scoped, tag = 'scoped memory for dqn_forward.1']
    %14 = vsyncpa [#allocation3], 0
    %15 = vsyncpa [#allocation5], 0
    %16 = vsyncpa [#allocation8], 0
    // Predicated region
    $region2: #{dqn_forward.1} parent=1 // pred_check
      _
    $region3: #{dqn_forward.1} parent=1 // pred_check_branch
      %18 = sbr.rel (0) target = $region5
    $region4: #{dqn_forward.1} parent=1 // pred_region
      _
    $region5: #{dqn_forward.1} parent=1 // pred_fallthru
      _
    // Predicated region
    $region6: #{dqn_forward.1} parent=1 // pred_check
      _
    $region7: #{dqn_forward.1} parent=1 // pred_check_branch
      %20 = sbr.rel (0) target = $region9
    $region8: #{dqn_forward.1} parent=1 // pred_region
      %s22 = ssub.s32 4096, 4096
      %23 = vsyncadd [#allocation3], %s22
      %s24 = sshll.u32 [#allocation2], 4
      %s25 = int_to_ptr.vmem [resolvable:$true] %s24
      %30 = dma.hbm_to_vmem [thread:$0]  %s1, 4096, %s25, [#allocation3], 128, 128, 8
    $region9: #{dqn_forward.1} parent=1 // pred_fallthru
      _
    // Predicated region
    $region10: #{dqn_forward.1} parent=1 // pred_check
      _
    $region11: #{dqn_forward.1} parent=1 // pred_check_branch
      %32 = sbr.rel (0) target = $region13
    $region12: #{dqn_forward.1} parent=1 // pred_region
      _
    $region13: #{dqn_forward.1} parent=1 // pred_fallthru
      _
    // Predicated region
    $region14: #{dqn_forward.1} parent=1 // pred_check
      _
    $region15: #{dqn_forward.1} parent=1 // pred_check_branch
      %34 = sbr.rel (0) target = $region17
    $region16: #{dqn_forward.1} parent=1 // pred_region
      %s36 = ssub.s32 8192, 8192
      %37 = vsyncadd [#allocation5], %s36
      %s38 = sshll.u32 [#allocation4], 4
      %s39 = int_to_ptr.vmem [resolvable:$true] %s38
      %44 = dma.hbm_to_vmem [thread:$0]  %s3, 8192, %s39, [#allocation5], 256, 256, 16
    $region17: #{dqn_forward.1} parent=1 // pred_fallthru
      _
    // Predicated region
    $region18: #{dqn_forward.1} parent=1 // pred_check
      _
    $region19: #{dqn_forward.1} parent=1 // pred_check_branch
      %46 = sbr.rel (0) target = $region21
    $region20: #{dqn_forward.1} parent=1 // pred_region
      _
    $region21: #{dqn_forward.1} parent=1 // pred_fallthru
      _
    // Predicated region
    $region22: #{dqn_forward.1} parent=1 // pred_check
      _
    $region23: #{dqn_forward.1} parent=1 // pred_check_branch
      %48 = sbr.rel (0) target = $region25
    $region24: #{dqn_forward.1} parent=1 // pred_region
      %s50 = ssub.s32 16384, 16384
      %51 = vsyncadd [#allocation5], %s50
      %s52 = sshll.u32 [#allocation6], 4
      %s53 = int_to_ptr.vmem [resolvable:$true] %s52
      %58 = dma.hbm_to_vmem [thread:$0]  %s5, 16384, %s53, [#allocation5], 256, 256, 16
    $region25: #{dqn_forward.1} parent=1 // pred_fallthru
      _
    // Predicated region
    $region26: #{dqn_forward.1} parent=1 // pred_check
      _
    $region27: #{dqn_forward.1} parent=1 // pred_check_branch
      %60 = sbr.rel (0) target = $region29
    $region28: #{dqn_forward.1} parent=1 // pred_region
      _
    $region29: #{dqn_forward.1} parent=1 // pred_fallthru
      _
    // Predicated region
    $region30: #{dqn_forward.1} parent=1 // pred_check
      _
    $region31: #{dqn_forward.1} parent=1 // pred_check_branch
      %62 = sbr.rel (0) target = $region33
    $region32: #{dqn_forward.1} parent=1 // pred_region
      %s64 = ssub.s32 4096, 4096
      %65 = vsyncadd [#allocation8], %s64
      %s66 = sshll.u32 [#allocation7], 4
      %s67 = int_to_ptr.vmem [resolvable:$true] %s66
      %72 = dma.hbm_to_vmem [thread:$0]  %s7, 4096, %s67, [#allocation8], 64, 64, 4
    $region33: #{dqn_forward.1} parent=1 // pred_fallthru
      _
    // Predicated region
    $region34: #{dqn_forward.1} parent=1 // pred_check
      _
    $region35: #{dqn_forward.1} parent=1 // pred_check_branch
      %74 = sbr.rel (0) target = $region37
    $region36: #{dqn_forward.1} parent=1 // pred_region
      _
    $region37: #{dqn_forward.1} parent=1 // pred_fallthru
      _
    // Predicated region
    $region38: #{dqn_forward.1} parent=1 // pred_check
      _
    $region39: #{dqn_forward.1} parent=1 // pred_check_branch
      %76 = sbr.rel (0) target = $region41
    $region40: #{dqn_forward.1} parent=1 // pred_region
      %77 = dma.done [#allocation3], 4096
    $region41: #{dqn_forward.1} parent=1 // pred_fallthru
      _
    // Predicated region
    $region42: #{dqn_forward.1} parent=1 // pred_check
      _
    $region43: #{dqn_forward.1} parent=1 // pred_check_branch
      %79 = sbr.rel (0) target = $region45
    $region44: #{dqn_forward.1} parent=1 // pred_region
      %80 = dma.done [#allocation5], 8192
    $region45: #{dqn_forward.1} parent=1 // pred_fallthru
      _
    // Predicated region
    $region46: #{dqn_forward.1} parent=1 // pred_check
      _
    $region47: #{dqn_forward.1} parent=1 // pred_check_branch
      %82 = sbr.rel (0) target = $region49
    $region48: #{dqn_forward.1} parent=1 // pred_region
      %83 = dma.done [#allocation5], 16384
    $region49: #{dqn_forward.1} parent=1 // pred_fallthru
      _
    // Predicated region
    $region50: #{dqn_forward.1} parent=1 // pred_check
      _
    $region51: #{dqn_forward.1} parent=1 // pred_check_branch
      %85 = sbr.rel (0) target = $region53
    $region52: #{dqn_forward.1} parent=1 // pred_region
      %86 = dma.done [#allocation8], 4096
    $region53: #{dqn_forward.1} parent=1 // pred_fallthru
      _
    %v88 = vld [vmem:[%s0] sm:$0xff]
    %v89 = vld [vmem:[#allocation2] sm:$0xff]
    %v90 = vld [vmem:[#allocation2 + $0x8] sm:$0xff]
    %v91 = vld [vmem:[#allocation2 + $0x10] sm:$0xff]
    %v92 = vld [vmem:[#allocation2 + $0x18] sm:$0xff]
    %v93 = vld [vmem:[#allocation2 + $0x20] sm:$0xff]
    %v94 = vld [vmem:[#allocation2 + $0x28] sm:$0xff]
    %v95 = vld [vmem:[#allocation2 + $0x30] sm:$0xff]
    %v96 = vld [vmem:[#allocation2 + $0x38] sm:$0xff]
    %v97 = vld [vmem:[#allocation2 + $0x40] sm:$0xff]
    %v98 = vld [vmem:[#allocation2 + $0x48] sm:$0xff]
    %v99 = vld [vmem:[#allocation2 + $0x50] sm:$0xff]
    %v100 = vld [vmem:[#allocation2 + $0x58] sm:$0xff]
    %v101 = vld [vmem:[#allocation2 + $0x60] sm:$0xff]
    %v102 = vld [vmem:[#allocation2 + $0x68] sm:$0xff]
    %v103 = vld [vmem:[#allocation2 + $0x70] sm:$0xff]
    %v104 = vld [vmem:[#allocation2 + $0x78] sm:$0xff]
    %v105 = vld [vmem:[#allocation2 + $0x80] sm:$0xff]
    %v106 = vld [vmem:[#allocation2 + $0x88] sm:$0xff]
    %v107 = vld [vmem:[#allocation2 + $0x90] sm:$0xff]
    %v108 = vld [vmem:[#allocation2 + $0x98] sm:$0xff]
    %v109 = vld [vmem:[#allocation2 + $0xa0] sm:$0xff]
    %v110 = vld [vmem:[#allocation2 + $0xa8] sm:$0xff]
    %v111 = vld [vmem:[#allocation2 + $0xb0] sm:$0xff]
    %v112 = vld [vmem:[#allocation2 + $0xb8] sm:$0xff]
    %v113 = vld [vmem:[#allocation2 + $0xc0] sm:$0xff]
    %v114 = vld [vmem:[#allocation2 + $0xc8] sm:$0xff]
    %v115 = vld [vmem:[#allocation2 + $0xd0] sm:$0xff]
    %v116 = vld [vmem:[#allocation2 + $0xd8] sm:$0xff]
    %v117 = vld [vmem:[#allocation2 + $0xe0] sm:$0xff]
    %v118 = vld [vmem:[#allocation2 + $0xe8] sm:$0xff]
    %v119 = vld [vmem:[#allocation2 + $0xf0] sm:$0xff]
    %v120 = vld [vmem:[#allocation2 + $0xf8] sm:$0xff]
    %v121 = vld [vmem:[%s2] sm:$0x3]
    %v123 = vlaneseq
    %v124 = vshrl.u32 %v123, 7
    %v125 = vsub.s32 0, %v124
    %v126 = vrot.slane %v121, %v125
    %v127 = vlaneseq
    %v128 = vshrl.u32 %v127, 7
    %v129 = vsub.s32 1, %v128
    %v130 = vrot.slane %v121, %v129
    %v134 = vunpack.c.l.b16 %v88
    %v135 = vunpack.c.h.b16 %v88
    %v136 = vpack.c.b16 %v134, %v134
    %v137 = vpack.c.b16 %v135, %v135
    %v172 = vunpack.c.l.b16 %v89
    %v173 = vunpack.c.h.b16 %v89
    %v174 = vunpack.c.l.b16 %v90
    %v175 = vunpack.c.h.b16 %v90
    %v176 = vunpack.c.l.b16 %v91
    %v177 = vunpack.c.h.b16 %v91
    %v178 = vunpack.c.l.b16 %v92
    %v179 = vunpack.c.h.b16 %v92
    %v180 = vunpack.c.l.b16 %v93
    %v181 = vunpack.c.h.b16 %v93
    %v182 = vunpack.c.l.b16 %v94
    %v183 = vunpack.c.h.b16 %v94
    %v184 = vunpack.c.l.b16 %v95
    %v185 = vunpack.c.h.b16 %v95
    %v186 = vunpack.c.l.b16 %v96
    %v187 = vunpack.c.h.b16 %v96
    %v188 = vunpack.c.l.b16 %v97
    %v189 = vunpack.c.h.b16 %v97
    %v190 = vunpack.c.l.b16 %v98
    %v191 = vunpack.c.h.b16 %v98
    %v192 = vunpack.c.l.b16 %v99
    %v193 = vunpack.c.h.b16 %v99
    %v194 = vunpack.c.l.b16 %v100
    %v195 = vunpack.c.h.b16 %v100
    %v196 = vunpack.c.l.b16 %v101
    %v197 = vunpack.c.h.b16 %v101
    %v198 = vunpack.c.l.b16 %v102
    %v199 = vunpack.c.h.b16 %v102
    %v200 = vunpack.c.l.b16 %v103
    %v201 = vunpack.c.h.b16 %v103
    %v202 = vunpack.c.l.b16 %v104
    %v203 = vunpack.c.h.b16 %v104
    %v204 = vunpack.c.l.b16 %v105
    %v205 = vunpack.c.h.b16 %v105
    %v206 = vunpack.c.l.b16 %v106
    %v207 = vunpack.c.h.b16 %v106
    %v208 = vunpack.c.l.b16 %v107
    %v209 = vunpack.c.h.b16 %v107
    %v210 = vunpack.c.l.b16 %v108
    %v211 = vunpack.c.h.b16 %v108
    %v212 = vunpack.c.l.b16 %v109
    %v213 = vunpack.c.h.b16 %v109
    %v214 = vunpack.c.l.b16 %v110
    %v215 = vunpack.c.h.b16 %v110
    %v216 = vunpack.c.l.b16 %v111
    %v217 = vunpack.c.h.b16 %v111
    %v218 = vunpack.c.l.b16 %v112
    %v219 = vunpack.c.h.b16 %v112
    %v220 = vunpack.c.l.b16 %v113
    %v221 = vunpack.c.h.b16 %v113
    %v222 = vunpack.c.l.b16 %v114
    %v223 = vunpack.c.h.b16 %v114
    %v224 = vunpack.c.l.b16 %v115
    %v225 = vunpack.c.h.b16 %v115
    %v226 = vunpack.c.l.b16 %v116
    %v227 = vunpack.c.h.b16 %v116
    %v228 = vunpack.c.l.b16 %v117
    %v229 = vunpack.c.h.b16 %v117
    %v230 = vunpack.c.l.b16 %v118
    %v231 = vunpack.c.h.b16 %v118
    %v232 = vunpack.c.l.b16 %v119
    %v233 = vunpack.c.h.b16 %v119
    %v234 = vunpack.c.l.b16 %v120
    %v235 = vunpack.c.h.b16 %v120
    %v236 = vpack.c.b16 %v174, %v172
    %v237 = vpack.c.b16 %v175, %v173
    %v238 = vpack.c.b16 %v178, %v176
    %v239 = vpack.c.b16 %v179, %v177
    %v240 = vpack.c.b16 %v182, %v180
    %v241 = vpack.c.b16 %v183, %v181
    %v242 = vpack.c.b16 %v186, %v184
    %v243 = vpack.c.b16 %v187, %v185
    %v244 = vpack.c.b16 %v190, %v188
    %v245 = vpack.c.b16 %v191, %v189
    %v246 = vpack.c.b16 %v194, %v192
    %v247 = vpack.c.b16 %v195, %v193
    %v248 = vpack.c.b16 %v198, %v196
    %v249 = vpack.c.b16 %v199, %v197
    %v250 = vpack.c.b16 %v202, %v200
    %v251 = vpack.c.b16 %v203, %v201
    %v252 = vpack.c.b16 %v206, %v204
    %v253 = vpack.c.b16 %v207, %v205
    %v254 = vpack.c.b16 %v210, %v208
    %v255 = vpack.c.b16 %v211, %v209
    %v256 = vpack.c.b16 %v214, %v212
    %v257 = vpack.c.b16 %v215, %v213
    %v258 = vpack.c.b16 %v218, %v216
    %v259 = vpack.c.b16 %v219, %v217
    %v260 = vpack.c.b16 %v222, %v220
    %v261 = vpack.c.b16 %v223, %v221
    %v262 = vpack.c.b16 %v226, %v224
    %v263 = vpack.c.b16 %v227, %v225
    %v264 = vpack.c.b16 %v230, %v228
    %v265 = vpack.c.b16 %v231, %v229
    %v266 = vpack.c.b16 %v234, %v232
    %v267 = vpack.c.b16 %v235, %v233
    %300 = vmatprep.subr.bf16.mxu0 %v237
    %301 = vmatpush1.bf16.msra.mxu0 %v236
    %302 = vmatprep.subr.bf16.mxu0 %v239
    %303 = vmatpush1.bf16.msra.mxu0 %v238
    %304 = vmatprep.subr.bf16.mxu0 %v241
    %305 = vmatpush1.bf16.msra.mxu0 %v240
    %306 = vmatprep.subr.bf16.mxu0 %v243
    %307 = vmatpush1.bf16.msra.mxu0 %v242
    %308 = vmatprep.subr.bf16.mxu0 %v245
    %309 = vmatpush1.bf16.msra.mxu0 %v244
    %310 = vmatprep.subr.bf16.mxu0 %v247
    %311 = vmatpush1.bf16.msra.mxu0 %v246
    %312 = vmatprep.subr.bf16.mxu0 %v249
    %313 = vmatpush1.bf16.msra.mxu0 %v248
    %314 = vmatprep.subr.bf16.mxu0 %v251
    %315 = vmatpush1.bf16.msra.mxu0 %v250
    %316 = vmatprep.subr.bf16.mxu0 %v253
    %317 = vmatpush1.bf16.msra.mxu0 %v252
    %318 = vmatprep.subr.bf16.mxu0 %v255
    %319 = vmatpush1.bf16.msra.mxu0 %v254
    %320 = vmatprep.subr.bf16.mxu0 %v257
    %321 = vmatpush1.bf16.msra.mxu0 %v256
    %322 = vmatprep.subr.bf16.mxu0 %v259
    %323 = vmatpush1.bf16.msra.mxu0 %v258
    %324 = vmatprep.subr.bf16.mxu0 %v261
    %325 = vmatpush1.bf16.msra.mxu0 %v260
    %326 = vmatprep.subr.bf16.mxu0 %v263
    %327 = vmatpush1.bf16.msra.mxu0 %v262
    %328 = vmatprep.subr.bf16.mxu0 %v265
    %329 = vmatpush1.bf16.msra.mxu0 %v264
    %330 = vmatprep.subr.bf16.mxu0 %v267
    %331 = vmatpush1.bf16.msra.mxu0 %v266
    %332 = vmatprep.mubr.bf16.mxu0 %v137
    %333 = vmatmul.mubr.bf16.gmra.mrb[0].mxu0 %v136
    %v334 = vpop.f32.mrb[0].mxu0
    %v335 = vadd.f32 %v126, %v334
    %v336 = vpop.f32.mrb[0].mxu0
    %v337 = vadd.f32 %v130, %v336
    %v338 = vpop.f32.mrb[0].mxu0
    %v339 = vpop.f32.mrb[0].mxu0
    %340 = vdwg.mxu0
    %v341 = vmax.f32 %v335, 0.0
    %v342 = vmax.f32 %v337, 0.0
    %v343 = vpack.c.bf16 %v341, %v341
    %v344 = vpack.c.bf16 %v342, %v342
    %v345 = vld [vmem:[#allocation4] sm:$0xff]
    %v346 = vld [vmem:[#allocation4 + $0x8] sm:$0xff]
    %v347 = vld [vmem:[#allocation4 + $0x10] sm:$0xff]
    %v348 = vld [vmem:[#allocation4 + $0x18] sm:$0xff]
    %v349 = vld [vmem:[#allocation4 + $0x20] sm:$0xff]
    %v350 = vld [vmem:[#allocation4 + $0x28] sm:$0xff]
    %v351 = vld [vmem:[#allocation4 + $0x30] sm:$0xff]
    %v352 = vld [vmem:[#allocation4 + $0x38] sm:$0xff]
    %v353 = vld [vmem:[#allocation4 + $0x40] sm:$0xff]
    %v354 = vld [vmem:[#allocation4 + $0x48] sm:$0xff]
    %v355 = vld [vmem:[#allocation4 + $0x50] sm:$0xff]
    %v356 = vld [vmem:[#allocation4 + $0x58] sm:$0xff]
    %v357 = vld [vmem:[#allocation4 + $0x60] sm:$0xff]
    %v358 = vld [vmem:[#allocation4 + $0x68] sm:$0xff]
    %v359 = vld [vmem:[#allocation4 + $0x70] sm:$0xff]
    %v360 = vld [vmem:[#allocation4 + $0x78] sm:$0xff]
    %v361 = vld [vmem:[#allocation4 + $0x80] sm:$0xff]
    %v362 = vld [vmem:[#allocation4 + $0x88] sm:$0xff]
    %v363 = vld [vmem:[#allocation4 + $0x90] sm:$0xff]
    %v364 = vld [vmem:[#allocation4 + $0x98] sm:$0xff]
    %v365 = vld [vmem:[#allocation4 + $0xa0] sm:$0xff]
    %v366 = vld [vmem:[#allocation4 + $0xa8] sm:$0xff]
    %v367 = vld [vmem:[#allocation4 + $0xb0] sm:$0xff]
    %v368 = vld [vmem:[#allocation4 + $0xb8] sm:$0xff]
    %v369 = vld [vmem:[#allocation4 + $0xc0] sm:$0xff]
    %v370 = vld [vmem:[#allocation4 + $0xc8] sm:$0xff]
    %v371 = vld [vmem:[#allocation4 + $0xd0] sm:$0xff]
    %v372 = vld [vmem:[#allocation4 + $0xd8] sm:$0xff]
    %v373 = vld [vmem:[#allocation4 + $0xe0] sm:$0xff]
    %v374 = vld [vmem:[#allocation4 + $0xe8] sm:$0xff]
    %v375 = vld [vmem:[#allocation4 + $0xf0] sm:$0xff]
    %v376 = vld [vmem:[#allocation4 + $0xf8] sm:$0xff]
    %v377 = vld [vmem:[#allocation4 + $0x100] sm:$0xff]
    %v378 = vld [vmem:[#allocation4 + $0x108] sm:$0xff]
    %v379 = vld [vmem:[#allocation4 + $0x110] sm:$0xff]
    %v380 = vld [vmem:[#allocation4 + $0x118] sm:$0xff]
    %v381 = vld [vmem:[#allocation4 + $0x120] sm:$0xff]
    %v382 = vld [vmem:[#allocation4 + $0x128] sm:$0xff]
    %v383 = vld [vmem:[#allocation4 + $0x130] sm:$0xff]
    %v384 = vld [vmem:[#allocation4 + $0x138] sm:$0xff]
    %v385 = vld [vmem:[#allocation4 + $0x140] sm:$0xff]
    %v386 = vld [vmem:[#allocation4 + $0x148] sm:$0xff]
    %v387 = vld [vmem:[#allocation4 + $0x150] sm:$0xff]
    %v388 = vld [vmem:[#allocation4 + $0x158] sm:$0xff]
    %v389 = vld [vmem:[#allocation4 + $0x160] sm:$0xff]
    %v390 = vld [vmem:[#allocation4 + $0x168] sm:$0xff]
    %v391 = vld [vmem:[#allocation4 + $0x170] sm:$0xff]
    %v392 = vld [vmem:[#allocation4 + $0x178] sm:$0xff]
    %v393 = vld [vmem:[#allocation4 + $0x180] sm:$0xff]
    %v394 = vld [vmem:[#allocation4 + $0x188] sm:$0xff]
    %v395 = vld [vmem:[#allocation4 + $0x190] sm:$0xff]
    %v396 = vld [vmem:[#allocation4 + $0x198] sm:$0xff]
    %v397 = vld [vmem:[#allocation4 + $0x1a0] sm:$0xff]
    %v398 = vld [vmem:[#allocation4 + $0x1a8] sm:$0xff]
    %v399 = vld [vmem:[#allocation4 + $0x1b0] sm:$0xff]
    %v400 = vld [vmem:[#allocation4 + $0x1b8] sm:$0xff]
    %v401 = vld [vmem:[#allocation4 + $0x1c0] sm:$0xff]
    %v402 = vld [vmem:[#allocation4 + $0x1c8] sm:$0xff]
    %v403 = vld [vmem:[#allocation4 + $0x1d0] sm:$0xff]
    %v404 = vld [vmem:[#allocation4 + $0x1d8] sm:$0xff]
    %v405 = vld [vmem:[#allocation4 + $0x1e0] sm:$0xff]
    %v406 = vld [vmem:[#allocation4 + $0x1e8] sm:$0xff]
    %v407 = vld [vmem:[#allocation4 + $0x1f0] sm:$0xff]
    %v408 = vld [vmem:[#allocation4 + $0x1f8] sm:$0xff]
    %v409 = vld [vmem:[%s4] sm:$0xf]
    %v411 = vlaneseq
    %v412 = vshrl.u32 %v411, 7
    %v413 = vsub.s32 0, %v412
    %v414 = vrot.slane %v409, %v413
    %v415 = vlaneseq
    %v416 = vshrl.u32 %v415, 7
    %v417 = vsub.s32 1, %v416
    %v418 = vrot.slane %v409, %v417
    %v419 = vlaneseq
    %v420 = vshrl.u32 %v419, 7
    %v421 = vsub.s32 2, %v420
    %v422 = vrot.slane %v409, %v421
    %v423 = vlaneseq
    %v424 = vshrl.u32 %v423, 7
    %v425 = vsub.s32 3, %v424
    %v426 = vrot.slane %v409, %v425
    %v495 = vunpack.c.l.b16 %v345
    %v496 = vunpack.c.h.b16 %v345
    %v497 = vunpack.c.l.b16 %v346
    %v498 = vunpack.c.h.b16 %v346
    %v499 = vunpack.c.l.b16 %v347
    %v500 = vunpack.c.h.b16 %v347
    %v501 = vunpack.c.l.b16 %v348
    %v502 = vunpack.c.h.b16 %v348
    %v503 = vunpack.c.l.b16 %v349
    %v504 = vunpack.c.h.b16 %v349
    %v505 = vunpack.c.l.b16 %v350
    %v506 = vunpack.c.h.b16 %v350
    %v507 = vunpack.c.l.b16 %v351
    %v508 = vunpack.c.h.b16 %v351
    %v509 = vunpack.c.l.b16 %v352
    %v510 = vunpack.c.h.b16 %v352
    %v511 = vunpack.c.l.b16 %v353
    %v512 = vunpack.c.h.b16 %v353
    %v513 = vunpack.c.l.b16 %v354
    %v514 = vunpack.c.h.b16 %v354
    %v515 = vunpack.c.l.b16 %v355
    %v516 = vunpack.c.h.b16 %v355
    %v517 = vunpack.c.l.b16 %v356
    %v518 = vunpack.c.h.b16 %v356
    %v519 = vunpack.c.l.b16 %v357
    %v520 = vunpack.c.h.b16 %v357
    %v521 = vunpack.c.l.b16 %v358
    %v522 = vunpack.c.h.b16 %v358
    %v523 = vunpack.c.l.b16 %v359
    %v524 = vunpack.c.h.b16 %v359
    %v525 = vunpack.c.l.b16 %v360
    %v526 = vunpack.c.h.b16 %v360
    %v527 = vunpack.c.l.b16 %v361
    %v528 = vunpack.c.h.b16 %v361
    %v529 = vunpack.c.l.b16 %v362
    %v530 = vunpack.c.h.b16 %v362
    %v531 = vunpack.c.l.b16 %v363
    %v532 = vunpack.c.h.b16 %v363
    %v533 = vunpack.c.l.b16 %v364
    %v534 = vunpack.c.h.b16 %v364
    %v535 = vunpack.c.l.b16 %v365
    %v536 = vunpack.c.h.b16 %v365
    %v537 = vunpack.c.l.b16 %v366
    %v538 = vunpack.c.h.b16 %v366
    %v539 = vunpack.c.l.b16 %v367
    %v540 = vunpack.c.h.b16 %v367
    %v541 = vunpack.c.l.b16 %v368
    %v542 = vunpack.c.h.b16 %v368
    %v543 = vunpack.c.l.b16 %v369
    %v544 = vunpack.c.h.b16 %v369
    %v545 = vunpack.c.l.b16 %v370
    %v546 = vunpack.c.h.b16 %v370
    %v547 = vunpack.c.l.b16 %v371
    %v548 = vunpack.c.h.b16 %v371
    %v549 = vunpack.c.l.b16 %v372
    %v550 = vunpack.c.h.b16 %v372
    %v551 = vunpack.c.l.b16 %v373
    %v552 = vunpack.c.h.b16 %v373
    %v553 = vunpack.c.l.b16 %v374
    %v554 = vunpack.c.h.b16 %v374
    %v555 = vunpack.c.l.b16 %v375
    %v556 = vunpack.c.h.b16 %v375
    %v557 = vunpack.c.l.b16 %v376
    %v558 = vunpack.c.h.b16 %v376
    %v559 = vunpack.c.l.b16 %v377
    %v560 = vunpack.c.h.b16 %v377
    %v561 = vunpack.c.l.b16 %v378
    %v562 = vunpack.c.h.b16 %v378
    %v563 = vunpack.c.l.b16 %v379
    %v564 = vunpack.c.h.b16 %v379
    %v565 = vunpack.c.l.b16 %v380
    %v566 = vunpack.c.h.b16 %v380
    %v567 = vunpack.c.l.b16 %v381
    %v568 = vunpack.c.h.b16 %v381
    %v569 = vunpack.c.l.b16 %v382
    %v570 = vunpack.c.h.b16 %v382
    %v571 = vunpack.c.l.b16 %v383
    %v572 = vunpack.c.h.b16 %v383
    %v573 = vunpack.c.l.b16 %v384
    %v574 = vunpack.c.h.b16 %v384
    %v575 = vunpack.c.l.b16 %v385
    %v576 = vunpack.c.h.b16 %v385
    %v577 = vunpack.c.l.b16 %v386
    %v578 = vunpack.c.h.b16 %v386
    %v579 = vunpack.c.l.b16 %v387
    %v580 = vunpack.c.h.b16 %v387
    %v581 = vunpack.c.l.b16 %v388
    %v582 = vunpack.c.h.b16 %v388
    %v583 = vunpack.c.l.b16 %v389
    %v584 = vunpack.c.h.b16 %v389
    %v585 = vunpack.c.l.b16 %v390
    %v586 = vunpack.c.h.b16 %v390
    %v587 = vunpack.c.l.b16 %v391
    %v588 = vunpack.c.h.b16 %v391
    %v589 = vunpack.c.l.b16 %v392
    %v590 = vunpack.c.h.b16 %v392
    %v591 = vunpack.c.l.b16 %v393
    %v592 = vunpack.c.h.b16 %v393
    %v593 = vunpack.c.l.b16 %v394
    %v594 = vunpack.c.h.b16 %v394
    %v595 = vunpack.c.l.b16 %v395
    %v596 = vunpack.c.h.b16 %v395
    %v597 = vunpack.c.l.b16 %v396
    %v598 = vunpack.c.h.b16 %v396
    %v599 = vunpack.c.l.b16 %v397
    %v600 = vunpack.c.h.b16 %v397
    %v601 = vunpack.c.l.b16 %v398
    %v602 = vunpack.c.h.b16 %v398
    %v603 = vunpack.c.l.b16 %v399
    %v604 = vunpack.c.h.b16 %v399
    %v605 = vunpack.c.l.b16 %v400
    %v606 = vunpack.c.h.b16 %v400
    %v607 = vunpack.c.l.b16 %v401
    %v608 = vunpack.c.h.b16 %v401
    %v609 = vunpack.c.l.b16 %v402
    %v610 = vunpack.c.h.b16 %v402
    %v611 = vunpack.c.l.b16 %v403
    %v612 = vunpack.c.h.b16 %v403
    %v613 = vunpack.c.l.b16 %v404
    %v614 = vunpack.c.h.b16 %v404
    %v615 = vunpack.c.l.b16 %v405
    %v616 = vunpack.c.h.b16 %v405
    %v617 = vunpack.c.l.b16 %v406
    %v618 = vunpack.c.h.b16 %v406
    %v619 = vunpack.c.l.b16 %v407
    %v620 = vunpack.c.h.b16 %v407
    %v621 = vunpack.c.l.b16 %v408
    %v622 = vunpack.c.h.b16 %v408
    %v623 = vpack.c.b16 %v499, %v495
    %v624 = vpack.c.b16 %v500, %v496
    %v625 = vpack.c.b16 %v501, %v497
    %v626 = vpack.c.b16 %v502, %v498
    %v627 = vpack.c.b16 %v507, %v503
    %v628 = vpack.c.b16 %v508, %v504
    %v629 = vpack.c.b16 %v509, %v505
    %v630 = vpack.c.b16 %v510, %v506
    %v631 = vpack.c.b16 %v515, %v511
    %v632 = vpack.c.b16 %v516, %v512
    %v633 = vpack.c.b16 %v517, %v513
    %v634 = vpack.c.b16 %v518, %v514
    %v635 = vpack.c.b16 %v523, %v519
    %v636 = vpack.c.b16 %v524, %v520
    %v637 = vpack.c.b16 %v525, %v521
    %v638 = vpack.c.b16 %v526, %v522
    %v639 = vpack.c.b16 %v531, %v527
    %v640 = vpack.c.b16 %v532, %v528
    %v641 = vpack.c.b16 %v533, %v529
    %v642 = vpack.c.b16 %v534, %v530
    %v643 = vpack.c.b16 %v539, %v535
    %v644 = vpack.c.b16 %v540, %v536
    %v645 = vpack.c.b16 %v541, %v537
    %v646 = vpack.c.b16 %v542, %v538
    %v647 = vpack.c.b16 %v547, %v543
    %v648 = vpack.c.b16 %v548, %v544
    %v649 = vpack.c.b16 %v549, %v545
    %v650 = vpack.c.b16 %v550, %v546
    %v651 = vpack.c.b16 %v555, %v551
    %v652 = vpack.c.b16 %v556, %v552
    %v653 = vpack.c.b16 %v557, %v553
    %v654 = vpack.c.b16 %v558, %v554
    %v655 = vpack.c.b16 %v563, %v559
    %v656 = vpack.c.b16 %v564, %v560
    %v657 = vpack.c.b16 %v565, %v561
    %v658 = vpack.c.b16 %v566, %v562
    %v659 = vpack.c.b16 %v571, %v567
    %v660 = vpack.c.b16 %v572, %v568
    %v661 = vpack.c.b16 %v573, %v569
    %v662 = vpack.c.b16 %v574, %v570
    %v663 = vpack.c.b16 %v579, %v575
    %v664 = vpack.c.b16 %v580, %v576
    %v665 = vpack.c.b16 %v581, %v577
    %v666 = vpack.c.b16 %v582, %v578
    %v667 = vpack.c.b16 %v587, %v583
    %v668 = vpack.c.b16 %v588, %v584
    %v669 = vpack.c.b16 %v589, %v585
    %v670 = vpack.c.b16 %v590, %v586
    %v671 = vpack.c.b16 %v595, %v591
    %v672 = vpack.c.b16 %v596, %v592
    %v673 = vpack.c.b16 %v597, %v593
    %v674 = vpack.c.b16 %v598, %v594
    %v675 = vpack.c.b16 %v603, %v599
    %v676 = vpack.c.b16 %v604, %v600
    %v677 = vpack.c.b16 %v605, %v601
    %v678 = vpack.c.b16 %v606, %v602
    %v679 = vpack.c.b16 %v611, %v607
    %v680 = vpack.c.b16 %v612, %v608
    %v681 = vpack.c.b16 %v613, %v609
    %v682 = vpack.c.b16 %v614, %v610
    %v683 = vpack.c.b16 %v619, %v615
    %v684 = vpack.c.b16 %v620, %v616
    %v685 = vpack.c.b16 %v621, %v617
    %v686 = vpack.c.b16 %v622, %v618
    %751 = vmatprep.subr.bf16.mxu0 %v624
    %752 = vmatpush1.bf16.msra.mxu0 %v623
    %753 = vmatprep.subr.bf16.mxu0 %v628
    %754 = vmatpush1.bf16.msra.mxu0 %v627
    %755 = vmatprep.subr.bf16.mxu0 %v632
    %756 = vmatpush1.bf16.msra.mxu0 %v631
    %757 = vmatprep.subr.bf16.mxu0 %v636
    %758 = vmatpush1.bf16.msra.mxu0 %v635
    %759 = vmatprep.subr.bf16.mxu0 %v640
    %760 = vmatpush1.bf16.msra.mxu0 %v639
    %761 = vmatprep.subr.bf16.mxu0 %v644
    %762 = vmatpush1.bf16.msra.mxu0 %v643
    %763 = vmatprep.subr.bf16.mxu0 %v648
    %764 = vmatpush1.bf16.msra.mxu0 %v647
    %765 = vmatprep.subr.bf16.mxu0 %v652
    %766 = vmatpush1.bf16.msra.mxu0 %v651
    %767 = vmatprep.subr.bf16.mxu0 %v656
    %768 = vmatpush1.bf16.msra.mxu0 %v655
    %769 = vmatprep.subr.bf16.mxu0 %v660
    %770 = vmatpush1.bf16.msra.mxu0 %v659
    %771 = vmatprep.subr.bf16.mxu0 %v664
    %772 = vmatpush1.bf16.msra.mxu0 %v663
    %773 = vmatprep.subr.bf16.mxu0 %v668
    %774 = vmatpush1.bf16.msra.mxu0 %v667
    %775 = vmatprep.subr.bf16.mxu0 %v672
    %776 = vmatpush1.bf16.msra.mxu0 %v671
    %777 = vmatprep.subr.bf16.mxu0 %v676
    %778 = vmatpush1.bf16.msra.mxu0 %v675
    %779 = vmatprep.subr.bf16.mxu0 %v680
    %780 = vmatpush1.bf16.msra.mxu0 %v679
    %781 = vmatprep.subr.bf16.mxu0 %v684
    %782 = vmatpush1.bf16.msra.mxu0 %v683
    %783 = vmatprep.mubr.bf16.mxu0 %v344
    %784 = vmatmul.mubr.bf16.gmra.mrb[0].mxu0 %v343
    %v785 = vpop.f32.mrb[0].mxu0
    %v786 = vadd.f32 %v414, %v785
    %v787 = vpop.f32.mrb[0].mxu0
    %v788 = vadd.f32 %v418, %v787
    %v789 = vpop.f32.mrb[0].mxu0
    %v790 = vpop.f32.mrb[0].mxu0
    %791 = vdwg.mxu0
    %792 = vmatprep.subr.bf16.mxu0 %v626
    %793 = vmatpush1.bf16.msra.mxu0 %v625
    %794 = vmatprep.subr.bf16.mxu0 %v630
    %795 = vmatpush1.bf16.msra.mxu0 %v629
    %796 = vmatprep.subr.bf16.mxu0 %v634
    %797 = vmatpush1.bf16.msra.mxu0 %v633
    %798 = vmatprep.subr.bf16.mxu0 %v638
    %799 = vmatpush1.bf16.msra.mxu0 %v637
    %800 = vmatprep.subr.bf16.mxu0 %v642
    %801 = vmatpush1.bf16.msra.mxu0 %v641
    %802 = vmatprep.subr.bf16.mxu0 %v646
    %803 = vmatpush1.bf16.msra.mxu0 %v645
    %804 = vmatprep.subr.bf16.mxu0 %v650
    %805 = vmatpush1.bf16.msra.mxu0 %v649
    %806 = vmatprep.subr.bf16.mxu0 %v654
    %807 = vmatpush1.bf16.msra.mxu0 %v653
    %808 = vmatprep.subr.bf16.mxu0 %v658
    %809 = vmatpush1.bf16.msra.mxu0 %v657
    %810 = vmatprep.subr.bf16.mxu0 %v662
    %811 = vmatpush1.bf16.msra.mxu0 %v661
    %812 = vmatprep.subr.bf16.mxu0 %v666
    %813 = vmatpush1.bf16.msra.mxu0 %v665
    %814 = vmatprep.subr.bf16.mxu0 %v670
    %815 = vmatpush1.bf16.msra.mxu0 %v669
    %816 = vmatprep.subr.bf16.mxu0 %v674
    %817 = vmatpush1.bf16.msra.mxu0 %v673
    %818 = vmatprep.subr.bf16.mxu0 %v678
    %819 = vmatpush1.bf16.msra.mxu0 %v677
    %820 = vmatprep.subr.bf16.mxu0 %v682
    %821 = vmatpush1.bf16.msra.mxu0 %v681
    %822 = vmatprep.subr.bf16.mxu0 %v686
    %823 = vmatpush1.bf16.msra.mxu0 %v685
    %824 = vmatprep.mubr.bf16.mxu0 %v344
    %825 = vmatmul.mubr.bf16.gmra.mrb[0].mxu0 %v343
    %v826 = vpop.f32.mrb[0].mxu0
    %v827 = vadd.f32 %v422, %v826
    %v828 = vpop.f32.mrb[0].mxu0
    %v829 = vadd.f32 %v426, %v828
    %v830 = vpop.f32.mrb[0].mxu0
    %v831 = vpop.f32.mrb[0].mxu0
    %832 = vdwg.mxu0
    %v833 = vmax.f32 %v786, 0.0
    %v834 = vmax.f32 %v788, 0.0
    %v835 = vmax.f32 %v827, 0.0
    %v836 = vmax.f32 %v829, 0.0
    %v837 = vpack.c.bf16 %v833, %v833
    %v838 = vpack.c.bf16 %v834, %v834
    %v839 = vpack.c.bf16 %v835, %v835
    %v840 = vpack.c.bf16 %v836, %v836
    %v841 = vld [vmem:[#allocation6] sm:$0xff]
    %v842 = vld [vmem:[#allocation6 + $0x8] sm:$0xff]
    %v843 = vld [vmem:[#allocation6 + $0x10] sm:$0xff]
    %v844 = vld [vmem:[#allocation6 + $0x18] sm:$0xff]
    %v845 = vld [vmem:[#allocation6 + $0x20] sm:$0xff]
    %v846 = vld [vmem:[#allocation6 + $0x28] sm:$0xff]
    %v847 = vld [vmem:[#allocation6 + $0x30] sm:$0xff]
    %v848 = vld [vmem:[#allocation6 + $0x38] sm:$0xff]
    %v849 = vld [vmem:[#allocation6 + $0x40] sm:$0xff]
    %v850 = vld [vmem:[#allocation6 + $0x48] sm:$0xff]
    %v851 = vld [vmem:[#allocation6 + $0x50] sm:$0xff]
    %v852 = vld [vmem:[#allocation6 + $0x58] sm:$0xff]
    %v853 = vld [vmem:[#allocation6 + $0x60] sm:$0xff]
    %v854 = vld [vmem:[#allocation6 + $0x68] sm:$0xff]
    %v855 = vld [vmem:[#allocation6 + $0x70] sm:$0xff]
    %v856 = vld [vmem:[#allocation6 + $0x78] sm:$0xff]
    %v857 = vld [vmem:[#allocation6 + $0x80] sm:$0xff]
    %v858 = vld [vmem:[#allocation6 + $0x88] sm:$0xff]
    %v859 = vld [vmem:[#allocation6 + $0x90] sm:$0xff]
    %v860 = vld [vmem:[#allocation6 + $0x98] sm:$0xff]
    %v861 = vld [vmem:[#allocation6 + $0xa0] sm:$0xff]
    %v862 = vld [vmem:[#allocation6 + $0xa8] sm:$0xff]
    %v863 = vld [vmem:[#allocation6 + $0xb0] sm:$0xff]
    %v864 = vld [vmem:[#allocation6 + $0xb8] sm:$0xff]
    %v865 = vld [vmem:[#allocation6 + $0xc0] sm:$0xff]
    %v866 = vld [vmem:[#allocation6 + $0xc8] sm:$0xff]
    %v867 = vld [vmem:[#allocation6 + $0xd0] sm:$0xff]
    %v868 = vld [vmem:[#allocation6 + $0xd8] sm:$0xff]
    %v869 = vld [vmem:[#allocation6 + $0xe0] sm:$0xff]
    %v870 = vld [vmem:[#allocation6 + $0xe8] sm:$0xff]
    %v871 = vld [vmem:[#allocation6 + $0xf0] sm:$0xff]
    %v872 = vld [vmem:[#allocation6 + $0xf8] sm:$0xff]
    %v873 = vld [vmem:[#allocation6 + $0x100] sm:$0xff]
    %v874 = vld [vmem:[#allocation6 + $0x108] sm:$0xff]
    %v875 = vld [vmem:[#allocation6 + $0x110] sm:$0xff]
    %v876 = vld [vmem:[#allocation6 + $0x118] sm:$0xff]
    %v877 = vld [vmem:[#allocation6 + $0x120] sm:$0xff]
    %v878 = vld [vmem:[#allocation6 + $0x128] sm:$0xff]
    %v879 = vld [vmem:[#allocation6 + $0x130] sm:$0xff]
    %v880 = vld [vmem:[#allocation6 + $0x138] sm:$0xff]
    %v881 = vld [vmem:[#allocation6 + $0x140] sm:$0xff]
    %v882 = vld [vmem:[#allocation6 + $0x148] sm:$0xff]
    %v883 = vld [vmem:[#allocation6 + $0x150] sm:$0xff]
    %v884 = vld [vmem:[#allocation6 + $0x158] sm:$0xff]
    %v885 = vld [vmem:[#allocation6 + $0x160] sm:$0xff]
    %v886 = vld [vmem:[#allocation6 + $0x168] sm:$0xff]
    %v887 = vld [vmem:[#allocation6 + $0x170] sm:$0xff]
    %v888 = vld [vmem:[#allocation6 + $0x178] sm:$0xff]
    %v889 = vld [vmem:[#allocation6 + $0x180] sm:$0xff]
    %v890 = vld [vmem:[#allocation6 + $0x188] sm:$0xff]
    %v891 = vld [vmem:[#allocation6 + $0x190] sm:$0xff]
    %v892 = vld [vmem:[#allocation6 + $0x198] sm:$0xff]
    %v893 = vld [vmem:[#allocation6 + $0x1a0] sm:$0xff]
    %v894 = vld [vmem:[#allocation6 + $0x1a8] sm:$0xff]
    %v895 = vld [vmem:[#allocation6 + $0x1b0] sm:$0xff]
    %v896 = vld [vmem:[#allocation6 + $0x1b8] sm:$0xff]
    %v897 = vld [vmem:[#allocation6 + $0x1c0] sm:$0xff]
    %v898 = vld [vmem:[#allocation6 + $0x1c8] sm:$0xff]
    %v899 = vld [vmem:[#allocation6 + $0x1d0] sm:$0xff]
    %v900 = vld [vmem:[#allocation6 + $0x1d8] sm:$0xff]
    %v901 = vld [vmem:[#allocation6 + $0x1e0] sm:$0xff]
    %v902 = vld [vmem:[#allocation6 + $0x1e8] sm:$0xff]
    %v903 = vld [vmem:[#allocation6 + $0x1f0] sm:$0xff]
    %v904 = vld [vmem:[#allocation6 + $0x1f8] sm:$0xff]
    %v905 = vld [vmem:[#allocation6 + $0x200] sm:$0xff]
    %v906 = vld [vmem:[#allocation6 + $0x208] sm:$0xff]
    %v907 = vld [vmem:[#allocation6 + $0x210] sm:$0xff]
    %v908 = vld [vmem:[#allocation6 + $0x218] sm:$0xff]
    %v909 = vld [vmem:[#allocation6 + $0x220] sm:$0xff]
    %v910 = vld [vmem:[#allocation6 + $0x228] sm:$0xff]
    %v911 = vld [vmem:[#allocation6 + $0x230] sm:$0xff]
    %v912 = vld [vmem:[#allocation6 + $0x238] sm:$0xff]
    %v913 = vld [vmem:[#allocation6 + $0x240] sm:$0xff]
    %v914 = vld [vmem:[#allocation6 + $0x248] sm:$0xff]
    %v915 = vld [vmem:[#allocation6 + $0x250] sm:$0xff]
    %v916 = vld [vmem:[#allocation6 + $0x258] sm:$0xff]
    %v917 = vld [vmem:[#allocation6 + $0x260] sm:$0xff]
    %v918 = vld [vmem:[#allocation6 + $0x268] sm:$0xff]
    %v919 = vld [vmem:[#allocation6 + $0x270] sm:$0xff]
    %v920 = vld [vmem:[#allocation6 + $0x278] sm:$0xff]
    %v921 = vld [vmem:[#allocation6 + $0x280] sm:$0xff]
    %v922 = vld [vmem:[#allocation6 + $0x288] sm:$0xff]
    %v923 = vld [vmem:[#allocation6 + $0x290] sm:$0xff]
    %v924 = vld [vmem:[#allocation6 + $0x298] sm:$0xff]
    %v925 = vld [vmem:[#allocation6 + $0x2a0] sm:$0xff]
    %v926 = vld [vmem:[#allocation6 + $0x2a8] sm:$0xff]
    %v927 = vld [vmem:[#allocation6 + $0x2b0] sm:$0xff]
    %v928 = vld [vmem:[#allocation6 + $0x2b8] sm:$0xff]
    %v929 = vld [vmem:[#allocation6 + $0x2c0] sm:$0xff]
    %v930 = vld [vmem:[#allocation6 + $0x2c8] sm:$0xff]
    %v931 = vld [vmem:[#allocation6 + $0x2d0] sm:$0xff]
    %v932 = vld [vmem:[#allocation6 + $0x2d8] sm:$0xff]
    %v933 = vld [vmem:[#allocation6 + $0x2e0] sm:$0xff]
    %v934 = vld [vmem:[#allocation6 + $0x2e8] sm:$0xff]
    %v935 = vld [vmem:[#allocation6 + $0x2f0] sm:$0xff]
    %v936 = vld [vmem:[#allocation6 + $0x2f8] sm:$0xff]
    %v937 = vld [vmem:[#allocation6 + $0x300] sm:$0xff]
    %v938 = vld [vmem:[#allocation6 + $0x308] sm:$0xff]
    %v939 = vld [vmem:[#allocation6 + $0x310] sm:$0xff]
    %v940 = vld [vmem:[#allocation6 + $0x318] sm:$0xff]
    %v941 = vld [vmem:[#allocation6 + $0x320] sm:$0xff]
    %v942 = vld [vmem:[#allocation6 + $0x328] sm:$0xff]
    %v943 = vld [vmem:[#allocation6 + $0x330] sm:$0xff]
    %v944 = vld [vmem:[#allocation6 + $0x338] sm:$0xff]
    %v945 = vld [vmem:[#allocation6 + $0x340] sm:$0xff]
    %v946 = vld [vmem:[#allocation6 + $0x348] sm:$0xff]
    %v947 = vld [vmem:[#allocation6 + $0x350] sm:$0xff]
    %v948 = vld [vmem:[#allocation6 + $0x358] sm:$0xff]
    %v949 = vld [vmem:[#allocation6 + $0x360] sm:$0xff]
    %v950 = vld [vmem:[#allocation6 + $0x368] sm:$0xff]
    %v951 = vld [vmem:[#allocation6 + $0x370] sm:$0xff]
    %v952 = vld [vmem:[#allocation6 + $0x378] sm:$0xff]
    %v953 = vld [vmem:[#allocation6 + $0x380] sm:$0xff]
    %v954 = vld [vmem:[#allocation6 + $0x388] sm:$0xff]
    %v955 = vld [vmem:[#allocation6 + $0x390] sm:$0xff]
    %v956 = vld [vmem:[#allocation6 + $0x398] sm:$0xff]
    %v957 = vld [vmem:[#allocation6 + $0x3a0] sm:$0xff]
    %v958 = vld [vmem:[#allocation6 + $0x3a8] sm:$0xff]
    %v959 = vld [vmem:[#allocation6 + $0x3b0] sm:$0xff]
    %v960 = vld [vmem:[#allocation6 + $0x3b8] sm:$0xff]
    %v961 = vld [vmem:[#allocation6 + $0x3c0] sm:$0xff]
    %v962 = vld [vmem:[#allocation6 + $0x3c8] sm:$0xff]
    %v963 = vld [vmem:[#allocation6 + $0x3d0] sm:$0xff]
    %v964 = vld [vmem:[#allocation6 + $0x3d8] sm:$0xff]
    %v965 = vld [vmem:[#allocation6 + $0x3e0] sm:$0xff]
    %v966 = vld [vmem:[#allocation6 + $0x3e8] sm:$0xff]
    %v967 = vld [vmem:[#allocation6 + $0x3f0] sm:$0xff]
    %v968 = vld [vmem:[#allocation6 + $0x3f8] sm:$0xff]
    %v969 = vld [vmem:[%s6] sm:$0xf]
    %v971 = vlaneseq
    %v972 = vshrl.u32 %v971, 7
    %v973 = vsub.s32 0, %v972
    %v974 = vrot.slane %v969, %v973
    %v975 = vlaneseq
    %v976 = vshrl.u32 %v975, 7
    %v977 = vsub.s32 1, %v976
    %v978 = vrot.slane %v969, %v977
    %v979 = vlaneseq
    %v980 = vshrl.u32 %v979, 7
    %v981 = vsub.s32 2, %v980
    %v982 = vrot.slane %v969, %v981
    %v983 = vlaneseq
    %v984 = vshrl.u32 %v983, 7
    %v985 = vsub.s32 3, %v984
    %v986 = vrot.slane %v969, %v985
    %v1119 = vunpack.c.l.b16 %v841
    %v1120 = vunpack.c.h.b16 %v841
    %v1121 = vunpack.c.l.b16 %v842
    %v1122 = vunpack.c.h.b16 %v842
    %v1123 = vunpack.c.l.b16 %v843
    %v1124 = vunpack.c.h.b16 %v843
    %v1125 = vunpack.c.l.b16 %v844
    %v1126 = vunpack.c.h.b16 %v844
    %v1127 = vunpack.c.l.b16 %v845
    %v1128 = vunpack.c.h.b16 %v845
    %v1129 = vunpack.c.l.b16 %v846
    %v1130 = vunpack.c.h.b16 %v846
    %v1131 = vunpack.c.l.b16 %v847
    %v1132 = vunpack.c.h.b16 %v847
    %v1133 = vunpack.c.l.b16 %v848
    %v1134 = vunpack.c.h.b16 %v848
    %v1135 = vunpack.c.l.b16 %v849
    %v1136 = vunpack.c.h.b16 %v849
    %v1137 = vunpack.c.l.b16 %v850
    %v1138 = vunpack.c.h.b16 %v850
    %v1139 = vunpack.c.l.b16 %v851
    %v1140 = vunpack.c.h.b16 %v851
    %v1141 = vunpack.c.l.b16 %v852
    %v1142 = vunpack.c.h.b16 %v852
    %v1143 = vunpack.c.l.b16 %v853
    %v1144 = vunpack.c.h.b16 %v853
    %v1145 = vunpack.c.l.b16 %v854
    %v1146 = vunpack.c.h.b16 %v854
    %v1147 = vunpack.c.l.b16 %v855
    %v1148 = vunpack.c.h.b16 %v855
    %v1149 = vunpack.c.l.b16 %v856
    %v1150 = vunpack.c.h.b16 %v856
    %v1151 = vunpack.c.l.b16 %v857
    %v1152 = vunpack.c.h.b16 %v857
    %v1153 = vunpack.c.l.b16 %v858
    %v1154 = vunpack.c.h.b16 %v858
    %v1155 = vunpack.c.l.b16 %v859
    %v1156 = vunpack.c.h.b16 %v859
    %v1157 = vunpack.c.l.b16 %v860
    %v1158 = vunpack.c.h.b16 %v860
    %v1159 = vunpack.c.l.b16 %v861
    %v1160 = vunpack.c.h.b16 %v861
    %v1161 = vunpack.c.l.b16 %v862
    %v1162 = vunpack.c.h.b16 %v862
    %v1163 = vunpack.c.l.b16 %v863
    %v1164 = vunpack.c.h.b16 %v863
    %v1165 = vunpack.c.l.b16 %v864
    %v1166 = vunpack.c.h.b16 %v864
    %v1167 = vunpack.c.l.b16 %v865
    %v1168 = vunpack.c.h.b16 %v865
    %v1169 = vunpack.c.l.b16 %v866
    %v1170 = vunpack.c.h.b16 %v866
    %v1171 = vunpack.c.l.b16 %v867
    %v1172 = vunpack.c.h.b16 %v867
    %v1173 = vunpack.c.l.b16 %v868
    %v1174 = vunpack.c.h.b16 %v868
    %v1175 = vunpack.c.l.b16 %v869
    %v1176 = vunpack.c.h.b16 %v869
    %v1177 = vunpack.c.l.b16 %v870
    %v1178 = vunpack.c.h.b16 %v870
    %v1179 = vunpack.c.l.b16 %v871
    %v1180 = vunpack.c.h.b16 %v871
    %v1181 = vunpack.c.l.b16 %v872
    %v1182 = vunpack.c.h.b16 %v872
    %v1183 = vunpack.c.l.b16 %v873
    %v1184 = vunpack.c.h.b16 %v873
    %v1185 = vunpack.c.l.b16 %v874
    %v1186 = vunpack.c.h.b16 %v874
    %v1187 = vunpack.c.l.b16 %v875
    %v1188 = vunpack.c.h.b16 %v875
    %v1189 = vunpack.c.l.b16 %v876
    %v1190 = vunpack.c.h.b16 %v876
    %v1191 = vunpack.c.l.b16 %v877
    %v1192 = vunpack.c.h.b16 %v877
    %v1193 = vunpack.c.l.b16 %v878
    %v1194 = vunpack.c.h.b16 %v878
    %v1195 = vunpack.c.l.b16 %v879
    %v1196 = vunpack.c.h.b16 %v879
    %v1197 = vunpack.c.l.b16 %v880
    %v1198 = vunpack.c.h.b16 %v880
    %v1199 = vunpack.c.l.b16 %v881
    %v1200 = vunpack.c.h.b16 %v881
    %v1201 = vunpack.c.l.b16 %v882
    %v1202 = vunpack.c.h.b16 %v882
    %v1203 = vunpack.c.l.b16 %v883
    %v1204 = vunpack.c.h.b16 %v883
    %v1205 = vunpack.c.l.b16 %v884
    %v1206 = vunpack.c.h.b16 %v884
    %v1207 = vunpack.c.l.b16 %v885
    %v1208 = vunpack.c.h.b16 %v885
    %v1209 = vunpack.c.l.b16 %v886
    %v1210 = vunpack.c.h.b16 %v886
    %v1211 = vunpack.c.l.b16 %v887
    %v1212 = vunpack.c.h.b16 %v887
    %v1213 = vunpack.c.l.b16 %v888
    %v1214 = vunpack.c.h.b16 %v888
    %v1215 = vunpack.c.l.b16 %v889
    %v1216 = vunpack.c.h.b16 %v889
    %v1217 = vunpack.c.l.b16 %v890
    %v1218 = vunpack.c.h.b16 %v890
    %v1219 = vunpack.c.l.b16 %v891
    %v1220 = vunpack.c.h.b16 %v891
    %v1221 = vunpack.c.l.b16 %v892
    %v1222 = vunpack.c.h.b16 %v892
    %v1223 = vunpack.c.l.b16 %v893
    %v1224 = vunpack.c.h.b16 %v893
    %v1225 = vunpack.c.l.b16 %v894
    %v1226 = vunpack.c.h.b16 %v894
    %v1227 = vunpack.c.l.b16 %v895
    %v1228 = vunpack.c.h.b16 %v895
    %v1229 = vunpack.c.l.b16 %v896
    %v1230 = vunpack.c.h.b16 %v896
    %v1231 = vunpack.c.l.b16 %v897
    %v1232 = vunpack.c.h.b16 %v897
    %v1233 = vunpack.c.l.b16 %v898
    %v1234 = vunpack.c.h.b16 %v898
    %v1235 = vunpack.c.l.b16 %v899
    %v1236 = vunpack.c.h.b16 %v899
    %v1237 = vunpack.c.l.b16 %v900
    %v1238 = vunpack.c.h.b16 %v900
    %v1239 = vunpack.c.l.b16 %v901
    %v1240 = vunpack.c.h.b16 %v901
    %v1241 = vunpack.c.l.b16 %v902
    %v1242 = vunpack.c.h.b16 %v902
    %v1243 = vunpack.c.l.b16 %v903
    %v1244 = vunpack.c.h.b16 %v903
    %v1245 = vunpack.c.l.b16 %v904
    %v1246 = vunpack.c.h.b16 %v904
    %v1247 = vunpack.c.l.b16 %v905
    %v1248 = vunpack.c.h.b16 %v905
    %v1249 = vunpack.c.l.b16 %v906
    %v1250 = vunpack.c.h.b16 %v906
    %v1251 = vunpack.c.l.b16 %v907
    %v1252 = vunpack.c.h.b16 %v907
    %v1253 = vunpack.c.l.b16 %v908
    %v1254 = vunpack.c.h.b16 %v908
    %v1255 = vunpack.c.l.b16 %v909
    %v1256 = vunpack.c.h.b16 %v909
    %v1257 = vunpack.c.l.b16 %v910
    %v1258 = vunpack.c.h.b16 %v910
    %v1259 = vunpack.c.l.b16 %v911
    %v1260 = vunpack.c.h.b16 %v911
    %v1261 = vunpack.c.l.b16 %v912
    %v1262 = vunpack.c.h.b16 %v912
    %v1263 = vunpack.c.l.b16 %v913
    %v1264 = vunpack.c.h.b16 %v913
    %v1265 = vunpack.c.l.b16 %v914
    %v1266 = vunpack.c.h.b16 %v914
    %v1267 = vunpack.c.l.b16 %v915
    %v1268 = vunpack.c.h.b16 %v915
    %v1269 = vunpack.c.l.b16 %v916
    %v1270 = vunpack.c.h.b16 %v916
    %v1271 = vunpack.c.l.b16 %v917
    %v1272 = vunpack.c.h.b16 %v917
    %v1273 = vunpack.c.l.b16 %v918
    %v1274 = vunpack.c.h.b16 %v918
    %v1275 = vunpack.c.l.b16 %v919
    %v1276 = vunpack.c.h.b16 %v919
    %v1277 = vunpack.c.l.b16 %v920
    %v1278 = vunpack.c.h.b16 %v920
    %v1279 = vunpack.c.l.b16 %v921
    %v1280 = vunpack.c.h.b16 %v921
    %v1281 = vunpack.c.l.b16 %v922
    %v1282 = vunpack.c.h.b16 %v922
    %v1283 = vunpack.c.l.b16 %v923
    %v1284 = vunpack.c.h.b16 %v923
    %v1285 = vunpack.c.l.b16 %v924
    %v1286 = vunpack.c.h.b16 %v924
    %v1287 = vunpack.c.l.b16 %v925
    %v1288 = vunpack.c.h.b16 %v925
    %v1289 = vunpack.c.l.b16 %v926
    %v1290 = vunpack.c.h.b16 %v926
    %v1291 = vunpack.c.l.b16 %v927
    %v1292 = vunpack.c.h.b16 %v927
    %v1293 = vunpack.c.l.b16 %v928
    %v1294 = vunpack.c.h.b16 %v928
    %v1295 = vunpack.c.l.b16 %v929
    %v1296 = vunpack.c.h.b16 %v929
    %v1297 = vunpack.c.l.b16 %v930
    %v1298 = vunpack.c.h.b16 %v930
    %v1299 = vunpack.c.l.b16 %v931
    %v1300 = vunpack.c.h.b16 %v931
    %v1301 = vunpack.c.l.b16 %v932
    %v1302 = vunpack.c.h.b16 %v932
    %v1303 = vunpack.c.l.b16 %v933
    %v1304 = vunpack.c.h.b16 %v933
    %v1305 = vunpack.c.l.b16 %v934
    %v1306 = vunpack.c.h.b16 %v934
    %v1307 = vunpack.c.l.b16 %v935
    %v1308 = vunpack.c.h.b16 %v935
    %v1309 = vunpack.c.l.b16 %v936
    %v1310 = vunpack.c.h.b16 %v936
    %v1311 = vunpack.c.l.b16 %v937
    %v1312 = vunpack.c.h.b16 %v937
    %v1313 = vunpack.c.l.b16 %v938
    %v1314 = vunpack.c.h.b16 %v938
    %v1315 = vunpack.c.l.b16 %v939
    %v1316 = vunpack.c.h.b16 %v939
    %v1317 = vunpack.c.l.b16 %v940
    %v1318 = vunpack.c.h.b16 %v940
    %v1319 = vunpack.c.l.b16 %v941
    %v1320 = vunpack.c.h.b16 %v941
    %v1321 = vunpack.c.l.b16 %v942
    %v1322 = vunpack.c.h.b16 %v942
    %v1323 = vunpack.c.l.b16 %v943
    %v1324 = vunpack.c.h.b16 %v943
    %v1325 = vunpack.c.l.b16 %v944
    %v1326 = vunpack.c.h.b16 %v944
    %v1327 = vunpack.c.l.b16 %v945
    %v1328 = vunpack.c.h.b16 %v945
    %v1329 = vunpack.c.l.b16 %v946
    %v1330 = vunpack.c.h.b16 %v946
    %v1331 = vunpack.c.l.b16 %v947
    %v1332 = vunpack.c.h.b16 %v947
    %v1333 = vunpack.c.l.b16 %v948
    %v1334 = vunpack.c.h.b16 %v948
    %v1335 = vunpack.c.l.b16 %v949
    %v1336 = vunpack.c.h.b16 %v949
    %v1337 = vunpack.c.l.b16 %v950
    %v1338 = vunpack.c.h.b16 %v950
    %v1339 = vunpack.c.l.b16 %v951
    %v1340 = vunpack.c.h.b16 %v951
    %v1341 = vunpack.c.l.b16 %v952
    %v1342 = vunpack.c.h.b16 %v952
    %v1343 = vunpack.c.l.b16 %v953
    %v1344 = vunpack.c.h.b16 %v953
    %v1345 = vunpack.c.l.b16 %v954
    %v1346 = vunpack.c.h.b16 %v954
    %v1347 = vunpack.c.l.b16 %v955
    %v1348 = vunpack.c.h.b16 %v955
    %v1349 = vunpack.c.l.b16 %v956
    %v1350 = vunpack.c.h.b16 %v956
    %v1351 = vunpack.c.l.b16 %v957
    %v1352 = vunpack.c.h.b16 %v957
    %v1353 = vunpack.c.l.b16 %v958
    %v1354 = vunpack.c.h.b16 %v958
    %v1355 = vunpack.c.l.b16 %v959
    %v1356 = vunpack.c.h.b16 %v959
    %v1357 = vunpack.c.l.b16 %v960
    %v1358 = vunpack.c.h.b16 %v960
    %v1359 = vunpack.c.l.b16 %v961
    %v1360 = vunpack.c.h.b16 %v961
    %v1361 = vunpack.c.l.b16 %v962
    %v1362 = vunpack.c.h.b16 %v962
    %v1363 = vunpack.c.l.b16 %v963
    %v1364 = vunpack.c.h.b16 %v963
    %v1365 = vunpack.c.l.b16 %v964
    %v1366 = vunpack.c.h.b16 %v964
    %v1367 = vunpack.c.l.b16 %v965
    %v1368 = vunpack.c.h.b16 %v965
    %v1369 = vunpack.c.l.b16 %v966
    %v1370 = vunpack.c.h.b16 %v966
    %v1371 = vunpack.c.l.b16 %v967
    %v1372 = vunpack.c.h.b16 %v967
    %v1373 = vunpack.c.l.b16 %v968
    %v1374 = vunpack.c.h.b16 %v968
    %v1375 = vpack.c.b16 %v1123, %v1119
    %v1376 = vpack.c.b16 %v1124, %v1120
    %v1377 = vpack.c.b16 %v1125, %v1121
    %v1378 = vpack.c.b16 %v1126, %v1122
    %v1379 = vpack.c.b16 %v1131, %v1127
    %v1380 = vpack.c.b16 %v1132, %v1128
    %v1381 = vpack.c.b16 %v1133, %v1129
    %v1382 = vpack.c.b16 %v1134, %v1130
    %v1383 = vpack.c.b16 %v1139, %v1135
    %v1384 = vpack.c.b16 %v1140, %v1136
    %v1385 = vpack.c.b16 %v1141, %v1137
    %v1386 = vpack.c.b16 %v1142, %v1138
    %v1387 = vpack.c.b16 %v1147, %v1143
    %v1388 = vpack.c.b16 %v1148, %v1144
    %v1389 = vpack.c.b16 %v1149, %v1145
    %v1390 = vpack.c.b16 %v1150, %v1146
    %v1391 = vpack.c.b16 %v1155, %v1151
    %v1392 = vpack.c.b16 %v1156, %v1152
    %v1393 = vpack.c.b16 %v1157, %v1153
    %v1394 = vpack.c.b16 %v1158, %v1154
    %v1395 = vpack.c.b16 %v1163, %v1159
    %v1396 = vpack.c.b16 %v1164, %v1160
    %v1397 = vpack.c.b16 %v1165, %v1161
    %v1398 = vpack.c.b16 %v1166, %v1162
    %v1399 = vpack.c.b16 %v1171, %v1167
    %v1400 = vpack.c.b16 %v1172, %v1168
    %v1401 = vpack.c.b16 %v1173, %v1169
    %v1402 = vpack.c.b16 %v1174, %v1170
    %v1403 = vpack.c.b16 %v1179, %v1175
    %v1404 = vpack.c.b16 %v1180, %v1176
    %v1405 = vpack.c.b16 %v1181, %v1177
    %v1406 = vpack.c.b16 %v1182, %v1178
    %v1407 = vpack.c.b16 %v1187, %v1183
    %v1408 = vpack.c.b16 %v1188, %v1184
    %v1409 = vpack.c.b16 %v1189, %v1185
    %v1410 = vpack.c.b16 %v1190, %v1186
    %v1411 = vpack.c.b16 %v1195, %v1191
    %v1412 = vpack.c.b16 %v1196, %v1192
    %v1413 = vpack.c.b16 %v1197, %v1193
    %v1414 = vpack.c.b16 %v1198, %v1194
    %v1415 = vpack.c.b16 %v1203, %v1199
    %v1416 = vpack.c.b16 %v1204, %v1200
    %v1417 = vpack.c.b16 %v1205, %v1201
    %v1418 = vpack.c.b16 %v1206, %v1202
    %v1419 = vpack.c.b16 %v1211, %v1207
    %v1420 = vpack.c.b16 %v1212, %v1208
    %v1421 = vpack.c.b16 %v1213, %v1209
    %v1422 = vpack.c.b16 %v1214, %v1210
    %v1423 = vpack.c.b16 %v1219, %v1215
    %v1424 = vpack.c.b16 %v1220, %v1216
    %v1425 = vpack.c.b16 %v1221, %v1217
    %v1426 = vpack.c.b16 %v1222, %v1218
    %v1427 = vpack.c.b16 %v1227, %v1223
    %v1428 = vpack.c.b16 %v1228, %v1224
    %v1429 = vpack.c.b16 %v1229, %v1225
    %v1430 = vpack.c.b16 %v1230, %v1226
    %v1431 = vpack.c.b16 %v1235, %v1231
    %v1432 = vpack.c.b16 %v1236, %v1232
    %v1433 = vpack.c.b16 %v1237, %v1233
    %v1434 = vpack.c.b16 %v1238, %v1234
    %v1435 = vpack.c.b16 %v1243, %v1239
    %v1436 = vpack.c.b16 %v1244, %v1240
    %v1437 = vpack.c.b16 %v1245, %v1241
    %v1438 = vpack.c.b16 %v1246, %v1242
    %v1439 = vpack.c.b16 %v1251, %v1247
    %v1440 = vpack.c.b16 %v1252, %v1248
    %v1441 = vpack.c.b16 %v1253, %v1249
    %v1442 = vpack.c.b16 %v1254, %v1250
    %v1443 = vpack.c.b16 %v1259, %v1255
    %v1444 = vpack.c.b16 %v1260, %v1256
    %v1445 = vpack.c.b16 %v1261, %v1257
    %v1446 = vpack.c.b16 %v1262, %v1258
    %v1447 = vpack.c.b16 %v1267, %v1263
    %v1448 = vpack.c.b16 %v1268, %v1264
    %v1449 = vpack.c.b16 %v1269, %v1265
    %v1450 = vpack.c.b16 %v1270, %v1266
    %v1451 = vpack.c.b16 %v1275, %v1271
    %v1452 = vpack.c.b16 %v1276, %v1272
    %v1453 = vpack.c.b16 %v1277, %v1273
    %v1454 = vpack.c.b16 %v1278, %v1274
    %v1455 = vpack.c.b16 %v1283, %v1279
    %v1456 = vpack.c.b16 %v1284, %v1280
    %v1457 = vpack.c.b16 %v1285, %v1281
    %v1458 = vpack.c.b16 %v1286, %v1282
    %v1459 = vpack.c.b16 %v1291, %v1287
    %v1460 = vpack.c.b16 %v1292, %v1288
    %v1461 = vpack.c.b16 %v1293, %v1289
    %v1462 = vpack.c.b16 %v1294, %v1290
    %v1463 = vpack.c.b16 %v1299, %v1295
    %v1464 = vpack.c.b16 %v1300, %v1296
    %v1465 = vpack.c.b16 %v1301, %v1297
    %v1466 = vpack.c.b16 %v1302, %v1298
    %v1467 = vpack.c.b16 %v1307, %v1303
    %v1468 = vpack.c.b16 %v1308, %v1304
    %v1469 = vpack.c.b16 %v1309, %v1305
    %v1470 = vpack.c.b16 %v1310, %v1306
    %v1471 = vpack.c.b16 %v1315, %v1311
    %v1472 = vpack.c.b16 %v1316, %v1312
    %v1473 = vpack.c.b16 %v1317, %v1313
    %v1474 = vpack.c.b16 %v1318, %v1314
    %v1475 = vpack.c.b16 %v1323, %v1319
    %v1476 = vpack.c.b16 %v1324, %v1320
    %v1477 = vpack.c.b16 %v1325, %v1321
    %v1478 = vpack.c.b16 %v1326, %v1322
    %v1479 = vpack.c.b16 %v1331, %v1327
    %v1480 = vpack.c.b16 %v1332, %v1328
    %v1481 = vpack.c.b16 %v1333, %v1329
    %v1482 = vpack.c.b16 %v1334, %v1330
    %v1483 = vpack.c.b16 %v1339, %v1335
    %v1484 = vpack.c.b16 %v1340, %v1336
    %v1485 = vpack.c.b16 %v1341, %v1337
    %v1486 = vpack.c.b16 %v1342, %v1338
    %v1487 = vpack.c.b16 %v1347, %v1343
    %v1488 = vpack.c.b16 %v1348, %v1344
    %v1489 = vpack.c.b16 %v1349, %v1345
    %v1490 = vpack.c.b16 %v1350, %v1346
    %v1491 = vpack.c.b16 %v1355, %v1351
    %v1492 = vpack.c.b16 %v1356, %v1352
    %v1493 = vpack.c.b16 %v1357, %v1353
    %v1494 = vpack.c.b16 %v1358, %v1354
    %v1495 = vpack.c.b16 %v1363, %v1359
    %v1496 = vpack.c.b16 %v1364, %v1360
    %v1497 = vpack.c.b16 %v1365, %v1361
    %v1498 = vpack.c.b16 %v1366, %v1362
    %v1499 = vpack.c.b16 %v1371, %v1367
    %v1500 = vpack.c.b16 %v1372, %v1368
    %v1501 = vpack.c.b16 %v1373, %v1369
    %v1502 = vpack.c.b16 %v1374, %v1370
    %1631 = vmatprep.subr.bf16.mxu0 %v1376
    %1632 = vmatpush1.bf16.msra.mxu0 %v1375
    %1633 = vmatprep.subr.bf16.mxu0 %v1380
    %1634 = vmatpush1.bf16.msra.mxu0 %v1379
    %1635 = vmatprep.subr.bf16.mxu0 %v1384
    %1636 = vmatpush1.bf16.msra.mxu0 %v1383
    %1637 = vmatprep.subr.bf16.mxu0 %v1388
    %1638 = vmatpush1.bf16.msra.mxu0 %v1387
    %1639 = vmatprep.subr.bf16.mxu0 %v1392
    %1640 = vmatpush1.bf16.msra.mxu0 %v1391
    %1641 = vmatprep.subr.bf16.mxu0 %v1396
    %1642 = vmatpush1.bf16.msra.mxu0 %v1395
    %1643 = vmatprep.subr.bf16.mxu0 %v1400
    %1644 = vmatpush1.bf16.msra.mxu0 %v1399
    %1645 = vmatprep.subr.bf16.mxu0 %v1404
    %1646 = vmatpush1.bf16.msra.mxu0 %v1403
    %1647 = vmatprep.subr.bf16.mxu0 %v1408
    %1648 = vmatpush1.bf16.msra.mxu0 %v1407
    %1649 = vmatprep.subr.bf16.mxu0 %v1412
    %1650 = vmatpush1.bf16.msra.mxu0 %v1411
    %1651 = vmatprep.subr.bf16.mxu0 %v1416
    %1652 = vmatpush1.bf16.msra.mxu0 %v1415
    %1653 = vmatprep.subr.bf16.mxu0 %v1420
    %1654 = vmatpush1.bf16.msra.mxu0 %v1419
    %1655 = vmatprep.subr.bf16.mxu0 %v1424
    %1656 = vmatpush1.bf16.msra.mxu0 %v1423
    %1657 = vmatprep.subr.bf16.mxu0 %v1428
    %1658 = vmatpush1.bf16.msra.mxu0 %v1427
    %1659 = vmatprep.subr.bf16.mxu0 %v1432
    %1660 = vmatpush1.bf16.msra.mxu0 %v1431
    %1661 = vmatprep.subr.bf16.mxu0 %v1436
    %1662 = vmatpush1.bf16.msra.mxu0 %v1435
    %1663 = vmatprep.mubr.bf16.mxu0 %v838
    %1664 = vmatmul.mubr.bf16.gmra.mrb[0].mxu0 %v837
    %v1665 = vpop.f32.mrb[0].mxu0
    %v1666 = vadd.f32 %v974, %v1665
    %v1667 = vpop.f32.mrb[0].mxu0
    %v1668 = vadd.f32 %v978, %v1667
    %v1669 = vpop.f32.mrb[0].mxu0
    %v1670 = vpop.f32.mrb[0].mxu0
    %1671 = vdwg.mxu0
    %1672 = vmatprep.subr.bf16.mxu0 %v1440
    %1673 = vmatpush1.bf16.msra.mxu0 %v1439
    %1674 = vmatprep.subr.bf16.mxu0 %v1444
    %1675 = vmatpush1.bf16.msra.mxu0 %v1443
    %1676 = vmatprep.subr.bf16.mxu0 %v1448
    %1677 = vmatpush1.bf16.msra.mxu0 %v1447
    %1678 = vmatprep.subr.bf16.mxu0 %v1452
    %1679 = vmatpush1.bf16.msra.mxu0 %v1451
    %1680 = vmatprep.subr.bf16.mxu0 %v1456
    %1681 = vmatpush1.bf16.msra.mxu0 %v1455
    %1682 = vmatprep.subr.bf16.mxu0 %v1460
    %1683 = vmatpush1.bf16.msra.mxu0 %v1459
    %1684 = vmatprep.subr.bf16.mxu0 %v1464
    %1685 = vmatpush1.bf16.msra.mxu0 %v1463
    %1686 = vmatprep.subr.bf16.mxu0 %v1468
    %1687 = vmatpush1.bf16.msra.mxu0 %v1467
    %1688 = vmatprep.subr.bf16.mxu0 %v1472
    %1689 = vmatpush1.bf16.msra.mxu0 %v1471
    %1690 = vmatprep.subr.bf16.mxu0 %v1476
    %1691 = vmatpush1.bf16.msra.mxu0 %v1475
    %1692 = vmatprep.subr.bf16.mxu0 %v1480
    %1693 = vmatpush1.bf16.msra.mxu0 %v1479
    %1694 = vmatprep.subr.bf16.mxu0 %v1484
    %1695 = vmatpush1.bf16.msra.mxu0 %v1483
    %1696 = vmatprep.subr.bf16.mxu0 %v1488
    %1697 = vmatpush1.bf16.msra.mxu0 %v1487
    %1698 = vmatprep.subr.bf16.mxu0 %v1492
    %1699 = vmatpush1.bf16.msra.mxu0 %v1491
    %1700 = vmatprep.subr.bf16.mxu0 %v1496
    %1701 = vmatpush1.bf16.msra.mxu0 %v1495
    %1702 = vmatprep.subr.bf16.mxu0 %v1500
    %1703 = vmatpush1.bf16.msra.mxu0 %v1499
    %1704 = vmatprep.mubr.bf16.mxu0 %v840
    %1705 = vmatmul.mubr.bf16.gmra.mrb[0].mxu0 %v839
    %v1706 = vpop.f32.mrb[0].mxu0
    %v1707 = vadd.f32 %v1666, %v1706
    %v1708 = vpop.f32.mrb[0].mxu0
    %v1709 = vadd.f32 %v1668, %v1708
    %v1710 = vpop.f32.mrb[0].mxu0
    %v1711 = vpop.f32.mrb[0].mxu0
    %1712 = vdwg.mxu0
    %1713 = vmatprep.subr.bf16.mxu0 %v1378
    %1714 = vmatpush1.bf16.msra.mxu0 %v1377
    %1715 = vmatprep.subr.bf16.mxu0 %v1382
    %1716 = vmatpush1.bf16.msra.mxu0 %v1381
    %1717 = vmatprep.subr.bf16.mxu0 %v1386
    %1718 = vmatpush1.bf16.msra.mxu0 %v1385
    %1719 = vmatprep.subr.bf16.mxu0 %v1390
    %1720 = vmatpush1.bf16.msra.mxu0 %v1389
    %1721 = vmatprep.subr.bf16.mxu0 %v1394
    %1722 = vmatpush1.bf16.msra.mxu0 %v1393
    %1723 = vmatprep.subr.bf16.mxu0 %v1398
    %1724 = vmatpush1.bf16.msra.mxu0 %v1397
    %1725 = vmatprep.subr.bf16.mxu0 %v1402
    %1726 = vmatpush1.bf16.msra.mxu0 %v1401
    %1727 = vmatprep.subr.bf16.mxu0 %v1406
    %1728 = vmatpush1.bf16.msra.mxu0 %v1405
    %1729 = vmatprep.subr.bf16.mxu0 %v1410
    %1730 = vmatpush1.bf16.msra.mxu0 %v1409
    %1731 = vmatprep.subr.bf16.mxu0 %v1414
    %1732 = vmatpush1.bf16.msra.mxu0 %v1413
    %1733 = vmatprep.subr.bf16.mxu0 %v1418
    %1734 = vmatpush1.bf16.msra.mxu0 %v1417
    %1735 = vmatprep.subr.bf16.mxu0 %v1422
    %1736 = vmatpush1.bf16.msra.mxu0 %v1421
    %1737 = vmatprep.subr.bf16.mxu0 %v1426
    %1738 = vmatpush1.bf16.msra.mxu0 %v1425
    %1739 = vmatprep.subr.bf16.mxu0 %v1430
    %1740 = vmatpush1.bf16.msra.mxu0 %v1429
    %1741 = vmatprep.subr.bf16.mxu0 %v1434
    %1742 = vmatpush1.bf16.msra.mxu0 %v1433
    %1743 = vmatprep.subr.bf16.mxu0 %v1438
    %1744 = vmatpush1.bf16.msra.mxu0 %v1437
    %1745 = vmatprep.mubr.bf16.mxu0 %v838
    %1746 = vmatmul.mubr.bf16.gmra.mrb[0].mxu0 %v837
    %v1747 = vpop.f32.mrb[0].mxu0
    %v1748 = vadd.f32 %v982, %v1747
    %v1749 = vpop.f32.mrb[0].mxu0
    %v1750 = vadd.f32 %v986, %v1749
    %v1751 = vpop.f32.mrb[0].mxu0
    %v1752 = vpop.f32.mrb[0].mxu0
    %1753 = vdwg.mxu0
    %1754 = vmatprep.subr.bf16.mxu0 %v1442
    %1755 = vmatpush1.bf16.msra.mxu0 %v1441
    %1756 = vmatprep.subr.bf16.mxu0 %v1446
    %1757 = vmatpush1.bf16.msra.mxu0 %v1445
    %1758 = vmatprep.subr.bf16.mxu0 %v1450
    %1759 = vmatpush1.bf16.msra.mxu0 %v1449
    %1760 = vmatprep.subr.bf16.mxu0 %v1454
    %1761 = vmatpush1.bf16.msra.mxu0 %v1453
    %1762 = vmatprep.subr.bf16.mxu0 %v1458
    %1763 = vmatpush1.bf16.msra.mxu0 %v1457
    %1764 = vmatprep.subr.bf16.mxu0 %v1462
    %1765 = vmatpush1.bf16.msra.mxu0 %v1461
    %1766 = vmatprep.subr.bf16.mxu0 %v1466
    %1767 = vmatpush1.bf16.msra.mxu0 %v1465
    %1768 = vmatprep.subr.bf16.mxu0 %v1470
    %1769 = vmatpush1.bf16.msra.mxu0 %v1469
    %1770 = vmatprep.subr.bf16.mxu0 %v1474
    %1771 = vmatpush1.bf16.msra.mxu0 %v1473
    %1772 = vmatprep.subr.bf16.mxu0 %v1478
    %1773 = vmatpush1.bf16.msra.mxu0 %v1477
    %1774 = vmatprep.subr.bf16.mxu0 %v1482
    %1775 = vmatpush1.bf16.msra.mxu0 %v1481
    %1776 = vmatprep.subr.bf16.mxu0 %v1486
    %1777 = vmatpush1.bf16.msra.mxu0 %v1485
    %1778 = vmatprep.subr.bf16.mxu0 %v1490
    %1779 = vmatpush1.bf16.msra.mxu0 %v1489
    %1780 = vmatprep.subr.bf16.mxu0 %v1494
    %1781 = vmatpush1.bf16.msra.mxu0 %v1493
    %1782 = vmatprep.subr.bf16.mxu0 %v1498
    %1783 = vmatpush1.bf16.msra.mxu0 %v1497
    %1784 = vmatprep.subr.bf16.mxu0 %v1502
    %1785 = vmatpush1.bf16.msra.mxu0 %v1501
    %1786 = vmatprep.mubr.bf16.mxu0 %v840
    %1787 = vmatmul.mubr.bf16.gmra.mrb[0].mxu0 %v839
    %v1788 = vpop.f32.mrb[0].mxu0
    %v1789 = vadd.f32 %v1748, %v1788
    %v1790 = vpop.f32.mrb[0].mxu0
    %v1791 = vadd.f32 %v1750, %v1790
    %v1792 = vpop.f32.mrb[0].mxu0
    %v1793 = vpop.f32.mrb[0].mxu0
    %1794 = vdwg.mxu0
    %v1795 = vmax.f32 %v1707, 0.0
    %v1796 = vmax.f32 %v1709, 0.0
    %v1797 = vmax.f32 %v1789, 0.0
    %v1798 = vmax.f32 %v1791, 0.0
    %v1799 = vpack.c.bf16 %v1795, %v1795
    %v1800 = vpack.c.bf16 %v1796, %v1796
    %v1801 = vpack.c.bf16 %v1797, %v1797
    %v1802 = vpack.c.bf16 %v1798, %v1798
    %v1803 = vld [vmem:[#allocation7] sm:$0xf]
    %v1804 = vld [vmem:[#allocation7 + $0x4] sm:$0xf]
    %v1805 = vld [vmem:[#allocation7 + $0x8] sm:$0xf]
    %v1806 = vld [vmem:[#allocation7 + $0xc] sm:$0xf]
    %v1807 = vld [vmem:[#allocation7 + $0x10] sm:$0xf]
    %v1808 = vld [vmem:[#allocation7 + $0x14] sm:$0xf]
    %v1809 = vld [vmem:[#allocation7 + $0x18] sm:$0xf]
    %v1810 = vld [vmem:[#allocation7 + $0x1c] sm:$0xf]
    %v1811 = vld [vmem:[#allocation7 + $0x20] sm:$0xf]
    %v1812 = vld [vmem:[#allocation7 + $0x24] sm:$0xf]
    %v1813 = vld [vmem:[#allocation7 + $0x28] sm:$0xf]
    %v1814 = vld [vmem:[#allocation7 + $0x2c] sm:$0xf]
    %v1815 = vld [vmem:[#allocation7 + $0x30] sm:$0xf]
    %v1816 = vld [vmem:[#allocation7 + $0x34] sm:$0xf]
    %v1817 = vld [vmem:[#allocation7 + $0x38] sm:$0xf]
    %v1818 = vld [vmem:[#allocation7 + $0x3c] sm:$0xf]
    %v1819 = vld [vmem:[#allocation7 + $0x40] sm:$0xf]
    %v1820 = vld [vmem:[#allocation7 + $0x44] sm:$0xf]
    %v1821 = vld [vmem:[#allocation7 + $0x48] sm:$0xf]
    %v1822 = vld [vmem:[#allocation7 + $0x4c] sm:$0xf]
    %v1823 = vld [vmem:[#allocation7 + $0x50] sm:$0xf]
    %v1824 = vld [vmem:[#allocation7 + $0x54] sm:$0xf]
    %v1825 = vld [vmem:[#allocation7 + $0x58] sm:$0xf]
    %v1826 = vld [vmem:[#allocation7 + $0x5c] sm:$0xf]
    %v1827 = vld [vmem:[#allocation7 + $0x60] sm:$0xf]
    %v1828 = vld [vmem:[#allocation7 + $0x64] sm:$0xf]
    %v1829 = vld [vmem:[#allocation7 + $0x68] sm:$0xf]
    %v1830 = vld [vmem:[#allocation7 + $0x6c] sm:$0xf]
    %v1831 = vld [vmem:[#allocation7 + $0x70] sm:$0xf]
    %v1832 = vld [vmem:[#allocation7 + $0x74] sm:$0xf]
    %v1833 = vld [vmem:[#allocation7 + $0x78] sm:$0xf]
    %v1834 = vld [vmem:[#allocation7 + $0x7c] sm:$0xf]
    %v1835 = vld [vmem:[#allocation7 + $0x80] sm:$0xf]
    %v1836 = vld [vmem:[#allocation7 + $0x84] sm:$0xf]
    %v1837 = vld [vmem:[#allocation7 + $0x88] sm:$0xf]
    %v1838 = vld [vmem:[#allocation7 + $0x8c] sm:$0xf]
    %v1839 = vld [vmem:[#allocation7 + $0x90] sm:$0xf]
    %v1840 = vld [vmem:[#allocation7 + $0x94] sm:$0xf]
    %v1841 = vld [vmem:[#allocation7 + $0x98] sm:$0xf]
    %v1842 = vld [vmem:[#allocation7 + $0x9c] sm:$0xf]
    %v1843 = vld [vmem:[#allocation7 + $0xa0] sm:$0xf]
    %v1844 = vld [vmem:[#allocation7 + $0xa4] sm:$0xf]
    %v1845 = vld [vmem:[#allocation7 + $0xa8] sm:$0xf]
    %v1846 = vld [vmem:[#allocation7 + $0xac] sm:$0xf]
    %v1847 = vld [vmem:[#allocation7 + $0xb0] sm:$0xf]
    %v1848 = vld [vmem:[#allocation7 + $0xb4] sm:$0xf]
    %v1849 = vld [vmem:[#allocation7 + $0xb8] sm:$0xf]
    %v1850 = vld [vmem:[#allocation7 + $0xbc] sm:$0xf]
    %v1851 = vld [vmem:[#allocation7 + $0xc0] sm:$0xf]
    %v1852 = vld [vmem:[#allocation7 + $0xc4] sm:$0xf]
    %v1853 = vld [vmem:[#allocation7 + $0xc8] sm:$0xf]
    %v1854 = vld [vmem:[#allocation7 + $0xcc] sm:$0xf]
    %v1855 = vld [vmem:[#allocation7 + $0xd0] sm:$0xf]
    %v1856 = vld [vmem:[#allocation7 + $0xd4] sm:$0xf]
    %v1857 = vld [vmem:[#allocation7 + $0xd8] sm:$0xf]
    %v1858 = vld [vmem:[#allocation7 + $0xdc] sm:$0xf]
    %v1859 = vld [vmem:[#allocation7 + $0xe0] sm:$0xf]
    %v1860 = vld [vmem:[#allocation7 + $0xe4] sm:$0xf]
    %v1861 = vld [vmem:[#allocation7 + $0xe8] sm:$0xf]
    %v1862 = vld [vmem:[#allocation7 + $0xec] sm:$0xf]
    %v1863 = vld [vmem:[#allocation7 + $0xf0] sm:$0xf]
    %v1864 = vld [vmem:[#allocation7 + $0xf4] sm:$0xf]
    %v1865 = vld [vmem:[#allocation7 + $0xf8] sm:$0xf]
    %v1866 = vld [vmem:[#allocation7 + $0xfc] sm:$0xf]
    %v1867 = vld [vmem:[%s8] sm:$0x1]
    %v1869 = vlaneseq
    %v1870 = vshrl.u32 %v1869, 7
    %v1871 = vsub.s32 0, %v1870
    %v1872 = vrot.slane %v1867, %v1871
    %v1938 = vunpack.c.l.b16 %v1803
    %v1939 = vunpack.c.l.b16 %v1804
    %v1940 = vunpack.c.l.b16 %v1805
    %v1941 = vunpack.c.l.b16 %v1806
    %v1942 = vunpack.c.l.b16 %v1807
    %v1943 = vunpack.c.l.b16 %v1808
    %v1944 = vunpack.c.l.b16 %v1809
    %v1945 = vunpack.c.l.b16 %v1810
    %v1946 = vunpack.c.l.b16 %v1811
    %v1947 = vunpack.c.l.b16 %v1812
    %v1948 = vunpack.c.l.b16 %v1813
    %v1949 = vunpack.c.l.b16 %v1814
    %v1950 = vunpack.c.l.b16 %v1815
    %v1951 = vunpack.c.l.b16 %v1816
    %v1952 = vunpack.c.l.b16 %v1817
    %v1953 = vunpack.c.l.b16 %v1818
    %v1954 = vunpack.c.l.b16 %v1819
    %v1955 = vunpack.c.l.b16 %v1820
    %v1956 = vunpack.c.l.b16 %v1821
    %v1957 = vunpack.c.l.b16 %v1822
    %v1958 = vunpack.c.l.b16 %v1823
    %v1959 = vunpack.c.l.b16 %v1824
    %v1960 = vunpack.c.l.b16 %v1825
    %v1961 = vunpack.c.l.b16 %v1826
    %v1962 = vunpack.c.l.b16 %v1827
    %v1963 = vunpack.c.l.b16 %v1828
    %v1964 = vunpack.c.l.b16 %v1829
    %v1965 = vunpack.c.l.b16 %v1830
    %v1966 = vunpack.c.l.b16 %v1831
    %v1967 = vunpack.c.l.b16 %v1832
    %v1968 = vunpack.c.l.b16 %v1833
    %v1969 = vunpack.c.l.b16 %v1834
    %v1970 = vunpack.c.l.b16 %v1835
    %v1971 = vunpack.c.l.b16 %v1836
    %v1972 = vunpack.c.l.b16 %v1837
    %v1973 = vunpack.c.l.b16 %v1838
    %v1974 = vunpack.c.l.b16 %v1839
    %v1975 = vunpack.c.l.b16 %v1840
    %v1976 = vunpack.c.l.b16 %v1841
    %v1977 = vunpack.c.l.b16 %v1842
    %v1978 = vunpack.c.l.b16 %v1843
    %v1979 = vunpack.c.l.b16 %v1844
    %v1980 = vunpack.c.l.b16 %v1845
    %v1981 = vunpack.c.l.b16 %v1846
    %v1982 = vunpack.c.l.b16 %v1847
    %v1983 = vunpack.c.l.b16 %v1848
    %v1984 = vunpack.c.l.b16 %v1849
    %v1985 = vunpack.c.l.b16 %v1850
    %v1986 = vunpack.c.l.b16 %v1851
    %v1987 = vunpack.c.l.b16 %v1852
    %v1988 = vunpack.c.l.b16 %v1853
    %v1989 = vunpack.c.l.b16 %v1854
    %v1990 = vunpack.c.l.b16 %v1855
    %v1991 = vunpack.c.l.b16 %v1856
    %v1992 = vunpack.c.l.b16 %v1857
    %v1993 = vunpack.c.l.b16 %v1858
    %v1994 = vunpack.c.l.b16 %v1859
    %v1995 = vunpack.c.l.b16 %v1860
    %v1996 = vunpack.c.l.b16 %v1861
    %v1997 = vunpack.c.l.b16 %v1862
    %v1998 = vunpack.c.l.b16 %v1863
    %v1999 = vunpack.c.l.b16 %v1864
    %v2000 = vunpack.c.l.b16 %v1865
    %v2001 = vunpack.c.l.b16 %v1866
    %v2002 = vpack.c.b16 %v1939, %v1938
    %v2003 = vpack.c.b16 %v1941, %v1940
    %v2004 = vpack.c.b16 %v1943, %v1942
    %v2005 = vpack.c.b16 %v1945, %v1944
    %v2006 = vpack.c.b16 %v1947, %v1946
    %v2007 = vpack.c.b16 %v1949, %v1948
    %v2008 = vpack.c.b16 %v1951, %v1950
    %v2009 = vpack.c.b16 %v1953, %v1952
    %v2010 = vpack.c.b16 %v1955, %v1954
    %v2011 = vpack.c.b16 %v1957, %v1956
    %v2012 = vpack.c.b16 %v1959, %v1958
    %v2013 = vpack.c.b16 %v1961, %v1960
    %v2014 = vpack.c.b16 %v1963, %v1962
    %v2015 = vpack.c.b16 %v1965, %v1964
    %v2016 = vpack.c.b16 %v1967, %v1966
    %v2017 = vpack.c.b16 %v1969, %v1968
    %v2018 = vpack.c.b16 %v1971, %v1970
    %v2019 = vpack.c.b16 %v1973, %v1972
    %v2020 = vpack.c.b16 %v1975, %v1974
    %v2021 = vpack.c.b16 %v1977, %v1976
    %v2022 = vpack.c.b16 %v1979, %v1978
    %v2023 = vpack.c.b16 %v1981, %v1980
    %v2024 = vpack.c.b16 %v1983, %v1982
    %v2025 = vpack.c.b16 %v1985, %v1984
    %v2026 = vpack.c.b16 %v1987, %v1986
    %v2027 = vpack.c.b16 %v1989, %v1988
    %v2028 = vpack.c.b16 %v1991, %v1990
    %v2029 = vpack.c.b16 %v1993, %v1992
    %v2030 = vpack.c.b16 %v1995, %v1994
    %v2031 = vpack.c.b16 %v1997, %v1996
    %v2032 = vpack.c.b16 %v1999, %v1998
    %v2033 = vpack.c.b16 %v2001, %v2000
    %2066 = vmatprep.subr.bf16.mxu0 0
    %2067 = vmatpush1.bf16.msra.mxu0 %v2002
    %2068 = vmatprep.subr.bf16.mxu0 0
    %2069 = vmatpush1.bf16.msra.mxu0 %v2003
    %2070 = vmatprep.subr.bf16.mxu0 0
    %2071 = vmatpush1.bf16.msra.mxu0 %v2004
    %2072 = vmatprep.subr.bf16.mxu0 0
    %2073 = vmatpush1.bf16.msra.mxu0 %v2005
    %2074 = vmatprep.subr.bf16.mxu0 0
    %2075 = vmatpush1.bf16.msra.mxu0 %v2006
    %2076 = vmatprep.subr.bf16.mxu0 0
    %2077 = vmatpush1.bf16.msra.mxu0 %v2007
    %2078 = vmatprep.subr.bf16.mxu0 0
    %2079 = vmatpush1.bf16.msra.mxu0 %v2008
    %2080 = vmatprep.subr.bf16.mxu0 0
    %2081 = vmatpush1.bf16.msra.mxu0 %v2009
    %2082 = vmatprep.subr.bf16.mxu0 0
    %2083 = vmatpush1.bf16.msra.mxu0 %v2010
    %2084 = vmatprep.subr.bf16.mxu0 0
    %2085 = vmatpush1.bf16.msra.mxu0 %v2011
    %2086 = vmatprep.subr.bf16.mxu0 0
    %2087 = vmatpush1.bf16.msra.mxu0 %v2012
    %2088 = vmatprep.subr.bf16.mxu0 0
    %2089 = vmatpush1.bf16.msra.mxu0 %v2013
    %2090 = vmatprep.subr.bf16.mxu0 0
    %2091 = vmatpush1.bf16.msra.mxu0 %v2014
    %2092 = vmatprep.subr.bf16.mxu0 0
    %2093 = vmatpush1.bf16.msra.mxu0 %v2015
    %2094 = vmatprep.subr.bf16.mxu0 0
    %2095 = vmatpush1.bf16.msra.mxu0 %v2016
    %2096 = vmatprep.subr.bf16.mxu0 0
    %2097 = vmatpush1.bf16.msra.mxu0 %v2017
    %2098 = vmatprep.mubr.bf16.mxu0 %v1800
    %2099 = vmatmul.mubr.bf16.gmra.mrb[0].mxu0 %v1799
    %v2100 = vpop.f32.mrb[0].mxu0
    %v2101 = vadd.f32 %v1872, %v2100
    %v2102 = vpop.f32.mrb[0].mxu0
    %v2103 = vpop.f32.mrb[0].mxu0
    %v2104 = vpop.f32.mrb[0].mxu0
    %2105 = vdwg.mxu0
    %2106 = vmatprep.subr.bf16.mxu0 0
    %2107 = vmatpush1.bf16.msra.mxu0 %v2018
    %2108 = vmatprep.subr.bf16.mxu0 0
    %2109 = vmatpush1.bf16.msra.mxu0 %v2019
    %2110 = vmatprep.subr.bf16.mxu0 0
    %2111 = vmatpush1.bf16.msra.mxu0 %v2020
    %2112 = vmatprep.subr.bf16.mxu0 0
    %2113 = vmatpush1.bf16.msra.mxu0 %v2021
    %2114 = vmatprep.subr.bf16.mxu0 0
    %2115 = vmatpush1.bf16.msra.mxu0 %v2022
    %2116 = vmatprep.subr.bf16.mxu0 0
    %2117 = vmatpush1.bf16.msra.mxu0 %v2023
    %2118 = vmatprep.subr.bf16.mxu0 0
    %2119 = vmatpush1.bf16.msra.mxu0 %v2024
    %2120 = vmatprep.subr.bf16.mxu0 0
    %2121 = vmatpush1.bf16.msra.mxu0 %v2025
    %2122 = vmatprep.subr.bf16.mxu0 0
    %2123 = vmatpush1.bf16.msra.mxu0 %v2026
    %2124 = vmatprep.subr.bf16.mxu0 0
    %2125 = vmatpush1.bf16.msra.mxu0 %v2027
    %2126 = vmatprep.subr.bf16.mxu0 0
    %2127 = vmatpush1.bf16.msra.mxu0 %v2028
    %2128 = vmatprep.subr.bf16.mxu0 0
    %2129 = vmatpush1.bf16.msra.mxu0 %v2029
    %2130 = vmatprep.subr.bf16.mxu0 0
    %2131 = vmatpush1.bf16.msra.mxu0 %v2030
    %2132 = vmatprep.subr.bf16.mxu0 0
    %2133 = vmatpush1.bf16.msra.mxu0 %v2031
    %2134 = vmatprep.subr.bf16.mxu0 0
    %2135 = vmatpush1.bf16.msra.mxu0 %v2032
    %2136 = vmatprep.subr.bf16.mxu0 0
    %2137 = vmatpush1.bf16.msra.mxu0 %v2033
    %2138 = vmatprep.mubr.bf16.mxu0 %v1802
    %2139 = vmatmul.mubr.bf16.gmra.mrb[0].mxu0 %v1801
    %v2140 = vpop.f32.mrb[0].mxu0
    %v2141 = vadd.f32 %v2101, %v2140
    %v2142 = vpop.f32.mrb[0].mxu0
    %v2143 = vpop.f32.mrb[0].mxu0
    %v2144 = vpop.f32.mrb[0].mxu0
    %2145 = vdwg.mxu0
    %v2146 = vmax.f32 %v2141, 0.0
    %v2147 = vpack.c.bf16 %v2146, %v2146
    %2148 = vst [vmem:[%s9] sm:$0xf] %v2147
    // Predicated region
    $region54: #{dqn_forward.1} parent=1 // pred_check
      _
    $region55: #{dqn_forward.1} parent=1 // pred_check_branch
      %2150 = sbr.rel (0) target = $region57
    $region56: #{dqn_forward.1} parent=1 // pred_region
      _
    $region57: #{dqn_forward.1} parent=1 // pred_fallthru
      _
    // Predicated region
    $region58: #{dqn_forward.1} parent=1 // pred_check
      _
    $region59: #{dqn_forward.1} parent=1 // pred_check_branch
      %2152 = sbr.rel (0) target = $region61
    $region60: #{dqn_forward.1} parent=1 // pred_region
      _
    $region61: #{dqn_forward.1} parent=1 // pred_fallthru
      _
    %2153 = vsyncpa [#allocation3], 1
    %2154 = vsyncpa [#allocation5], 1
    %2155 = vsyncpa [#allocation8], 1

</llo_original>
